<compile_context>
chip_gen: v7x
topology: tpu7x:2x2x1
jax: 0.10.0
libtpu: 0.0.40
codegen_flags: <defaults>
</compile_context>

<pallas_src>
import functools

import jax
import jax.numpy as jnp
from jax.experimental import pallas as pl
from jax.experimental.pallas import tpu as pltpu


def _round_up(x, m):
    return ((x + m - 1) // m) * m


def _layer_specs(input_size, latent_size):
    """(fan_in, fan_out, relu) for the 10 linear layers of the autoencoder."""
    enc = [input_size, 512, 256, 128, 64, latent_size]
    dec = [latent_size, 64, 128, 256, 512, input_size]
    specs = []
    for dims in (enc, dec):
        pairs = list(zip(dims[:-1], dims[1:]))
        for li, (fi, fo) in enumerate(pairs):
            specs.append((fi, fo, li != len(pairs) - 1))  # no ReLU on last layer of each half
    return specs


def make_params(key, input_size, latent_size, dtype=jnp.float32):
    """PyTorch-style U[-1/sqrt(fan_in), 1/sqrt(fan_in)] init.
    Weights are stored [in, out] (transposed from nn.Linear's [out, in])."""
    params = []
    for fan_in, fan_out, _ in _layer_specs(input_size, latent_size):
        key, kw, kb = jax.random.split(key, 3)
        bound = 1.0 / (fan_in ** 0.5)
        w = jax.random.uniform(kw, (fan_in, fan_out), dtype, -bound, bound)
        b = jax.random.uniform(kb, (fan_out,), dtype, -bound, bound)
        params.append((w, b))
    return params


_ROW_ALIGN = 16  # sublane alignment of each weight band inside its slab (bf16 tile = 16 rows)


def pack_params(params, input_size, latent_size, weight_dtype=jnp.bfloat16):
    """Pack 10 (w, b) pairs into 2 weight slabs (bf16) + 1 bias slab (f32).

    Slab 0 ("wide") holds layers with fan_out > 256, slab 1 ("narrow") the rest.
    Layer i occupies rows [row, row+fan_in) and cols [0, fan_out) of its slab.
    Returns (w_wide, w_narrow, biases, layout) with
      layout[i] = (slab_idx, row_offset, fan_in, fan_out, relu).
    """
    specs = _layer_specs(input_size, latent_size)
    groups = ([], [])  # layer indices per slab
    for i, (_, fo, _) in enumerate(specs):
        groups[0 if fo > 256 else 1].append(i)

    slabs = []
    layout = [None] * len(specs)
    for slab_idx, idxs in enumerate(groups):
        width = _round_up(max(specs[i][1] for i in idxs), 128)
        rows = sum(_round_up(specs[i][0], _ROW_ALIGN) for i in idxs)
        slab = jnp.zeros((rows, width), dtype=weight_dtype)
        off = 0
        for i in idxs:
            fi, fo, relu = specs[i]
            slab = slab.at[off:off + fi, 0:fo].set(params[i][0].astype(weight_dtype))
            layout[i] = (slab_idx, off, fi, fo, relu)
            off += _round_up(fi, _ROW_ALIGN)
        slabs.append(slab)

    bias_width = _round_up(max(fo for _, fo, _ in specs), 128)
    biases = jnp.zeros((len(specs), bias_width), jnp.float32)
    for i, (_, fo, _) in enumerate(specs):
        biases = biases.at[i, 0:fo].set(params[i][1].astype(jnp.float32))

    return slabs[0], slabs[1], biases, tuple(layout)


def _autoencoder_kernel(x_ref, w_wide_ref, w_narrow_ref, b_ref,
                        xn_ref, phihat_ref, *, layout):
    """Fully fused 10-layer MLP on one batch tile.

    Weights are carved out of the VMEM-resident slabs with static slices.
    Matmuls run bf16 x bf16 on the MXU with f32 accumulation; bias + ReLU and
    the running activation stay f32.
    """
    slabs = (w_wide_ref, w_narrow_ref)
    enc_out_idx = len(layout) // 2 - 1
    h = x_ref[...].astype(jnp.float32)
    for li, (slab_idx, row, fan_in, fan_out, relu) in enumerate(layout):
        w = slabs[slab_idx][row:row + fan_in, 0:fan_out]   # bf16, compile-time slice
        b = b_ref[li:li + 1, 0:fan_out]                    # f32 (1, fan_out)
        h = jnp.dot(h.astype(w.dtype), w,
                    preferred_element_type=jnp.float32) + b
        if relu:
            h = jnp.maximum(h, 0.0)
        if li == enc_out_idx:                 # encoder output (latent), no ReLU
            xn_ref[...] = h.astype(xn_ref.dtype)
    phihat_ref[...] = h.astype(phihat_ref.dtype)
    # TODO(synk): nn.Dropout(0.25) exists in the module but is never invoked in
    # forward(); intentionally omitted (matches PyTorch semantics).


def autoencoder_forward(x, packed, *, batch_tile=None):
    """x: [B, input_size] f32. Returns (x_n [B, latent], Phi_n_hat [B, input_size])."""
    w_wide, w_narrow, biases, layout = packed
    B, input_size = x.shape
    latent_size = layout[len(layout) // 2 - 1][3]

    # Batch tiling: constant index_map keeps the weight/bias slabs VMEM-resident
    # across tiles; activation/output tiles stream through the pipeline.
    # "parallel" lets v7x's two TensorCores each take a share of the batch tiles.
    if batch_tile is None:
        batch_tile = min(512, _round_up(B, 8))   # big tiles amortize per-step overhead
    TB = max(8, _round_up(batch_tile, 8))
    Bp = _round_up(B, TB)
    x_p = x if Bp == B else jnp.pad(x, ((0, Bp - B), (0, 0)))
    grid = (Bp // TB,)

    def nbytes(a):
        return a.size * a.dtype.itemsize

    flops = 2 * Bp * sum(fi * fo for _, _, fi, fo, _ in layout)
    bytes_accessed = (nbytes(x_p) + nbytes(w_wide) + nbytes(w_narrow) + nbytes(biases)
                      + Bp * (latent_size + input_size) * x.dtype.itemsize)

    kernel = functools.partial(_autoencoder_kernel, layout=layout)

    x_n, phi_hat = pl.pallas_call(
        kernel,
        out_shape=(
            jax.ShapeDtypeStruct((Bp, latent_size), x.dtype),
            jax.ShapeDtypeStruct((Bp, input_size), x.dtype),
        ),
        grid=grid,
        in_specs=[
            pl.BlockSpec((TB, input_size), lambda i: (i, 0)),   # activations: stream per tile
            pl.BlockSpec(w_wide.shape, lambda i: (0, 0)),       # weights: resident (constant idx)
            pl.BlockSpec(w_narrow.shape, lambda i: (0, 0)),
            pl.BlockSpec(biases.shape, lambda i: (0, 0)),
        ],
        out_specs=(
            pl.BlockSpec((TB, latent_size), lambda i: (i, 0)),
            pl.BlockSpec((TB, input_size), lambda i: (i, 0)),
        ),
        compiler_params=pltpu.CompilerParams(
            dimension_semantics=("parallel",)),
        cost_estimate=pl.CostEstimate(
            flops=flops, transcendentals=0, bytes_accessed=bytes_accessed),
    )(x_p, w_wide, w_narrow, biases)
    return x_n[:B], phi_hat[:B]


def reference_forward(x, params, input_size, latent_size, weight_dtype=jnp.bfloat16):
    """Plain-JAX reference using the same bf16 matmul inputs + f32 accumulation."""
    specs = _layer_specs(input_size, latent_size)
    h = x.astype(jnp.float32)
    x_n = None
    for i, ((w, b), (_, _, relu)) in enumerate(zip(params, specs)):
        h = jnp.dot(h.astype(weight_dtype), w.astype(weight_dtype),
                    preferred_element_type=jnp.float32) + b.astype(jnp.float32)
        if relu:
            h = jnp.maximum(h, 0.0)
        if i == len(specs) // 2 - 1:
            x_n = h
    return x_n, h


if __name__ == "__main__":
    # args = {'statedim': 256, 'num_obs': 8, 'linear_autoencoder': False}
    input_size = 256   # statedim
    latent_size = 8    # num_obs
    batch = 8

    key = jax.random.PRNGKey(0)
    key_x, key_p = jax.random.split(key)
    Phi_n = jax.random.normal(key_x, (batch, input_size), dtype=jnp.float32)

    params = make_params(key_p, input_size, latent_size)
    packed = pack_params(params, input_size, latent_size)

    x_n, Phi_n_hat = autoencoder_forward(Phi_n, packed)
    jax.block_until_ready((x_n, Phi_n_hat))

    # Verify against pure-JAX reference that uses the identical bf16 quantization
    # (differences come only from MXU accumulation ordering, typically < 1e-5).
    x_n_ref, Phi_n_hat_ref = reference_forward(Phi_n, params, input_size, latent_size)
    assert x_n.shape == (batch, latent_size)
    assert Phi_n_hat.shape == (batch, input_size)
    assert jnp.allclose(x_n, x_n_ref, atol=1e-2, rtol=1e-2), \
        float(jnp.max(jnp.abs(x_n - x_n_ref)))
    assert jnp.allclose(Phi_n_hat, Phi_n_hat_ref, atol=1e-2, rtol=1e-2), \
        float(jnp.max(jnp.abs(Phi_n_hat - Phi_n_hat_ref)))

    print("KERNEL_OK")
</pallas_src>

<mosaic_0001>
module attributes {stable_mosaic.version = 11 : i64} {
  func.func @_autoencoder_kernel(%arg0: i32, %arg1: memref<8x256xf32, #tpu.memory_space<vmem>>, %arg2: memref<512x512xbf16, #tpu.memory_space<vmem>>, %arg3: memref<1680x256xbf16, #tpu.memory_space<vmem>>, %arg4: memref<10x512xf32, #tpu.memory_space<vmem>>, %arg5: memref<8x8xf32, #tpu.memory_space<vmem>>, %arg6: memref<8x256xf32, #tpu.memory_space<vmem>>) attributes {dimension_semantics = [#tpu.dimension_semantics<parallel>], iteration_bounds = array<i64: 1>, scalar_prefetch = 0 : i64, scratch_operands = 0 : i64, tpu.core_type = #tpu.core_type<tc>, window_params = [{transform_indices = @transform_0, window_bounds = array<i64: 8, 256>}, {pipeline_mode = #tpu.pipeline_mode<synchronous>, transform_indices = @transform_1, window_bounds = array<i64: 512, 512>}, {pipeline_mode = #tpu.pipeline_mode<synchronous>, transform_indices = @transform_2, window_bounds = array<i64: 1680, 256>}, {pipeline_mode = #tpu.pipeline_mode<synchronous>, transform_indices = @transform_3, window_bounds = array<i64: 10, 512>}, {transform_indices = @transform_4, window_bounds = array<i64: 8, 8>}, {transform_indices = @transform_5, window_bounds = array<i64: 8, 256>}]} {
    %c0 = arith.constant 0 : index
    %c0_0 = arith.constant 0 : index
    %0 = vector.load %arg1[%c0, %c0_0] : memref<8x256xf32, #tpu.memory_space<vmem>>, vector<8x256xf32>
    %c0_1 = arith.constant 0 : index
    %c0_2 = arith.constant 0 : index
    %1 = vector.load %arg2[%c0_1, %c0_2] : memref<512x512xbf16, #tpu.memory_space<vmem>>, vector<256x512xbf16>
    %c0_3 = arith.constant 0 : index
    %c0_4 = arith.constant 0 : index
    %2 = vector.load %arg4[%c0_3, %c0_4] : memref<10x512xf32, #tpu.memory_space<vmem>>, vector<1x512xf32>
    %3 = arith.truncf %0 : vector<8x256xf32> to vector<8x256xbf16>
    %cst = arith.constant dense<0.000000e+00> : vector<8x512xf32>
    %4 = tpu.matmul %3, %1, %cst {dimension_numbers = #tpu.dot_dimension_numbers<[1], [0], [0], [1], [0, 0, 1, 1], [], []>} : vector<8x256xbf16>, vector<256x512xbf16>, vector<8x512xf32> -> vector<8x512xf32>
    %5 = vector.broadcast %2 : vector<1x512xf32> to vector<8x512xf32>
    %6 = arith.addf %4, %5 : vector<8x512xf32>
    %cst_5 = arith.constant 0.000000e+00 : f32
    %7 = vector.broadcast %cst_5 : f32 to vector<8x512xf32>
    %8 = arith.maximumf %6, %7 : vector<8x512xf32>
    %c0_6 = arith.constant 0 : index
    %c0_7 = arith.constant 0 : index
    %9 = vector.load %arg3[%c0_6, %c0_7] : memref<1680x256xbf16, #tpu.memory_space<vmem>>, vector<512x256xbf16>
    %c1 = arith.constant 1 : index
    %c0_8 = arith.constant 0 : index
    %10 = vector.load %arg4[%c1, %c0_8] : memref<10x512xf32, #tpu.memory_space<vmem>>, vector<1x256xf32>
    %11 = arith.truncf %8 : vector<8x512xf32> to vector<8x512xbf16>
    %cst_9 = arith.constant dense<0.000000e+00> : vector<8x256xf32>
    %12 = tpu.matmul %11, %9, %cst_9 {dimension_numbers = #tpu.dot_dimension_numbers<[1], [0], [0], [1], [0, 0, 1, 1], [], []>} : vector<8x512xbf16>, vector<512x256xbf16>, vector<8x256xf32> -> vector<8x256xf32>
    %13 = vector.broadcast %10 : vector<1x256xf32> to vector<8x256xf32>
    %14 = arith.addf %12, %13 : vector<8x256xf32>
    %cst_10 = arith.constant 0.000000e+00 : f32
    %15 = vector.broadcast %cst_10 : f32 to vector<8x256xf32>
    %16 = arith.maximumf %14, %15 : vector<8x256xf32>
    %c512 = arith.constant 512 : index
    %c0_11 = arith.constant 0 : index
    %17 = vector.load %arg3[%c512, %c0_11] : memref<1680x256xbf16, #tpu.memory_space<vmem>>, vector<256x128xbf16>
    %c2 = arith.constant 2 : index
    %c0_12 = arith.constant 0 : index
    %18 = vector.load %arg4[%c2, %c0_12] : memref<10x512xf32, #tpu.memory_space<vmem>>, vector<1x128xf32>
    %19 = arith.truncf %16 : vector<8x256xf32> to vector<8x256xbf16>
    %cst_13 = arith.constant dense<0.000000e+00> : vector<8x128xf32>
    %20 = tpu.matmul %19, %17, %cst_13 {dimension_numbers = #tpu.dot_dimension_numbers<[1], [0], [0], [1], [0, 0, 1, 1], [], []>} : vector<8x256xbf16>, vector<256x128xbf16>, vector<8x128xf32> -> vector<8x128xf32>
    %21 = vector.broadcast %18 : vector<1x128xf32> to vector<8x128xf32>
    %22 = arith.addf %20, %21 : vector<8x128xf32>
    %cst_14 = arith.constant 0.000000e+00 : f32
    %23 = vector.broadcast %cst_14 : f32 to vector<8x128xf32>
    %24 = arith.maximumf %22, %23 : vector<8x128xf32>
    %c768 = arith.constant 768 : index
    %c0_15 = arith.constant 0 : index
    %25 = vector.load %arg3[%c768, %c0_15] : memref<1680x256xbf16, #tpu.memory_space<vmem>>, vector<128x64xbf16>
    %c3 = arith.constant 3 : index
    %c0_16 = arith.constant 0 : index
    %26 = vector.load %arg4[%c3, %c0_16] : memref<10x512xf32, #tpu.memory_space<vmem>>, vector<1x64xf32>
    %27 = arith.truncf %24 : vector<8x128xf32> to vector<8x128xbf16>
    %cst_17 = arith.constant dense<0.000000e+00> : vector<8x64xf32>
    %28 = tpu.matmul %27, %25, %cst_17 {dimension_numbers = #tpu.dot_dimension_numbers<[1], [0], [0], [1], [0, 0, 1, 1], [], []>} : vector<8x128xbf16>, vector<128x64xbf16>, vector<8x64xf32> -> vector<8x64xf32>
    %29 = vector.broadcast %26 : vector<1x64xf32> to vector<8x64xf32>
    %30 = arith.addf %28, %29 : vector<8x64xf32>
    %cst_18 = arith.constant 0.000000e+00 : f32
    %31 = vector.broadcast %cst_18 : f32 to vector<8x64xf32>
    %32 = arith.maximumf %30, %31 : vector<8x64xf32>
    %c896 = arith.constant 896 : index
    %c0_19 = arith.constant 0 : index
    %33 = vector.load %arg3[%c896, %c0_19] : memref<1680x256xbf16, #tpu.memory_space<vmem>>, vector<64x8xbf16>
    %c4 = arith.constant 4 : index
    %c0_20 = arith.constant 0 : index
    %34 = vector.load %arg4[%c4, %c0_20] : memref<10x512xf32, #tpu.memory_space<vmem>>, vector<1x8xf32>
    %35 = arith.truncf %32 : vector<8x64xf32> to vector<8x64xbf16>
    %cst_21 = arith.constant dense<0.000000e+00> : vector<8x8xf32>
    %36 = tpu.matmul %35, %33, %cst_21 {dimension_numbers = #tpu.dot_dimension_numbers<[1], [0], [0], [1], [0, 0, 1, 1], [], []>} : vector<8x64xbf16>, vector<64x8xbf16>, vector<8x8xf32> -> vector<8x8xf32>
    %37 = vector.broadcast %34 : vector<1x8xf32> to vector<8x8xf32>
    %38 = arith.addf %36, %37 : vector<8x8xf32>
    %c0_22 = arith.constant 0 : index
    %c0_23 = arith.constant 0 : index
    %39 = vector.load %arg5[%c0_22, %c0_23] : memref<8x8xf32, #tpu.memory_space<vmem>>, vector<8x8xf32>
    tpu.vector_store %arg5[%c0_22, %c0_23], %38 {strides = array<i32>} : memref<8x8xf32, #tpu.memory_space<vmem>>, vector<8x8xf32>,
    %c960 = arith.constant 960 : index
    %c0_24 = arith.constant 0 : index
    %40 = vector.load %arg3[%c960, %c0_24] : memref<1680x256xbf16, #tpu.memory_space<vmem>>, vector<8x64xbf16>
    %c5 = arith.constant 5 : index
    %c0_25 = arith.constant 0 : index
    %41 = vector.load %arg4[%c5, %c0_25] : memref<10x512xf32, #tpu.memory_space<vmem>>, vector<1x64xf32>
    %42 = arith.truncf %38 : vector<8x8xf32> to vector<8x8xbf16>
    %cst_26 = arith.constant dense<0.000000e+00> : vector<8x64xf32>
    %43 = tpu.matmul %42, %40, %cst_26 {dimension_numbers = #tpu.dot_dimension_numbers<[1], [0], [0], [1], [0, 0, 1, 1], [], []>} : vector<8x8xbf16>, vector<8x64xbf16>, vector<8x64xf32> -> vector<8x64xf32>
    %44 = vector.broadcast %41 : vector<1x64xf32> to vector<8x64xf32>
    %45 = arith.addf %43, %44 : vector<8x64xf32>
    %cst_27 = arith.constant 0.000000e+00 : f32
    %46 = vector.broadcast %cst_27 : f32 to vector<8x64xf32>
    %47 = arith.maximumf %45, %46 : vector<8x64xf32>
    %c976 = arith.constant 976 : index
    %c0_28 = arith.constant 0 : index
    %48 = vector.load %arg3[%c976, %c0_28] : memref<1680x256xbf16, #tpu.memory_space<vmem>>, vector<64x128xbf16>
    %c6 = arith.constant 6 : index
    %c0_29 = arith.constant 0 : index
    %49 = vector.load %arg4[%c6, %c0_29] : memref<10x512xf32, #tpu.memory_space<vmem>>, vector<1x128xf32>
    %50 = arith.truncf %47 : vector<8x64xf32> to vector<8x64xbf16>
    %cst_30 = arith.constant dense<0.000000e+00> : vector<8x128xf32>
    %51 = tpu.matmul %50, %48, %cst_30 {dimension_numbers = #tpu.dot_dimension_numbers<[1], [0], [0], [1], [0, 0, 1, 1], [], []>} : vector<8x64xbf16>, vector<64x128xbf16>, vector<8x128xf32> -> vector<8x128xf32>
    %52 = vector.broadcast %49 : vector<1x128xf32> to vector<8x128xf32>
    %53 = arith.addf %51, %52 : vector<8x128xf32>
    %cst_31 = arith.constant 0.000000e+00 : f32
    %54 = vector.broadcast %cst_31 : f32 to vector<8x128xf32>
    %55 = arith.maximumf %53, %54 : vector<8x128xf32>
    %c1040 = arith.constant 1040 : index
    %c0_32 = arith.constant 0 : index
    %56 = vector.load %arg3[%c1040, %c0_32] : memref<1680x256xbf16, #tpu.memory_space<vmem>>, vector<128x256xbf16>
    %c7 = arith.constant 7 : index
    %c0_33 = arith.constant 0 : index
    %57 = vector.load %arg4[%c7, %c0_33] : memref<10x512xf32, #tpu.memory_space<vmem>>, vector<1x256xf32>
    %58 = arith.truncf %55 : vector<8x128xf32> to vector<8x128xbf16>
    %cst_34 = arith.constant dense<0.000000e+00> : vector<8x256xf32>
    %59 = tpu.matmul %58, %56, %cst_34 {dimension_numbers = #tpu.dot_dimension_numbers<[1], [0], [0], [1], [0, 0, 1, 1], [], []>} : vector<8x128xbf16>, vector<128x256xbf16>, vector<8x256xf32> -> vector<8x256xf32>
    %60 = vector.broadcast %57 : vector<1x256xf32> to vector<8x256xf32>
    %61 = arith.addf %59, %60 : vector<8x256xf32>
    %cst_35 = arith.constant 0.000000e+00 : f32
    %62 = vector.broadcast %cst_35 : f32 to vector<8x256xf32>
    %63 = arith.maximumf %61, %62 : vector<8x256xf32>
    %c256 = arith.constant 256 : index
    %c0_36 = arith.constant 0 : index
    %64 = vector.load %arg2[%c256, %c0_36] : memref<512x512xbf16, #tpu.memory_space<vmem>>, vector<256x512xbf16>
    %c8 = arith.constant 8 : index
    %c0_37 = arith.constant 0 : index
    %65 = vector.load %arg4[%c8, %c0_37] : memref<10x512xf32, #tpu.memory_space<vmem>>, vector<1x512xf32>
    %66 = arith.truncf %63 : vector<8x256xf32> to vector<8x256xbf16>
    %cst_38 = arith.constant dense<0.000000e+00> : vector<8x512xf32>
    %67 = tpu.matmul %66, %64, %cst_38 {dimension_numbers = #tpu.dot_dimension_numbers<[1], [0], [0], [1], [0, 0, 1, 1], [], []>} : vector<8x256xbf16>, vector<256x512xbf16>, vector<8x512xf32> -> vector<8x512xf32>
    %68 = vector.broadcast %65 : vector<1x512xf32> to vector<8x512xf32>
    %69 = arith.addf %67, %68 : vector<8x512xf32>
    %cst_39 = arith.constant 0.000000e+00 : f32
    %70 = vector.broadcast %cst_39 : f32 to vector<8x512xf32>
    %71 = arith.maximumf %69, %70 : vector<8x512xf32>
    %c1168 = arith.constant 1168 : index
    %c0_40 = arith.constant 0 : index
    %72 = vector.load %arg3[%c1168, %c0_40] : memref<1680x256xbf16, #tpu.memory_space<vmem>>, vector<512x256xbf16>
    %c9 = arith.constant 9 : index
    %c0_41 = arith.constant 0 : index
    %73 = vector.load %arg4[%c9, %c0_41] : memref<10x512xf32, #tpu.memory_space<vmem>>, vector<1x256xf32>
    %74 = arith.truncf %71 : vector<8x512xf32> to vector<8x512xbf16>
    %cst_42 = arith.constant dense<0.000000e+00> : vector<8x256xf32>
    %75 = tpu.matmul %74, %72, %cst_42 {dimension_numbers = #tpu.dot_dimension_numbers<[1], [0], [0], [1], [0, 0, 1, 1], [], []>} : vector<8x512xbf16>, vector<512x256xbf16>, vector<8x256xf32> -> vector<8x256xf32>
    %76 = vector.broadcast %73 : vector<1x256xf32> to vector<8x256xf32>
    %77 = arith.addf %75, %76 : vector<8x256xf32>
    %c0_43 = arith.constant 0 : index
    %c0_44 = arith.constant 0 : index
    %78 = vector.load %arg6[%c0_43, %c0_44] : memref<8x256xf32, #tpu.memory_space<vmem>>, vector<8x256xf32>
    tpu.vector_store %arg6[%c0_43, %c0_44], %77 {strides = array<i32>} : memref<8x256xf32, #tpu.memory_space<vmem>>, vector<8x256xf32>,
    return
  }
  func.func @transform_0(%arg0: i32) -> (i32, i32) {
    %c0_i32 = arith.constant 0 : i32
    %c0_i32_0 = arith.constant 0 : i32
    return %arg0, %c0_i32 : i32, i32
  }
  func.func @transform_1(%arg0: i32) -> (i32, i32) {
    %c0_i32 = arith.constant 0 : i32
    %c0_i32_0 = arith.constant 0 : i32
    %c0_i32_1 = arith.constant 0 : i32
    return %c0_i32, %c0_i32_0 : i32, i32
  }
  func.func @transform_2(%arg0: i32) -> (i32, i32) {
    %c0_i32 = arith.constant 0 : i32
    %c0_i32_0 = arith.constant 0 : i32
    %c0_i32_1 = arith.constant 0 : i32
    return %c0_i32, %c0_i32_0 : i32, i32
  }
  func.func @transform_3(%arg0: i32) -> (i32, i32) {
    %c0_i32 = arith.constant 0 : i32
    %c0_i32_0 = arith.constant 0 : i32
    %c0_i32_1 = arith.constant 0 : i32
    return %c0_i32, %c0_i32_0 : i32, i32
  }
  func.func @transform_4(%arg0: i32) -> (i32, i32) {
    %c0_i32 = arith.constant 0 : i32
    %c0_i32_0 = arith.constant 0 : i32
    return %arg0, %c0_i32 : i32, i32
  }
  func.func @transform_5(%arg0: i32) -> (i32, i32) {
    %c0_i32 = arith.constant 0 : i32
    %c0_i32_0 = arith.constant 0 : i32
    return %arg0, %c0_i32 : i32, i32
  }
}

</mosaic_0001>

<llo_original>
// kernel: tpu_custom_call.1
$region0: #{tpu_custom_call.1}
  #allocation0 [shape = 'u32[]', space=smem, size = 0x4, offset = 0x4, fixed_abs, tag = 'smem constant byte address 0x4 - core index']
  #allocation1 [shape = 'u32[144,128]{1,0:T(1,128)}', space=vmem, size = 0x12000, scoped, tag = 'internal scratch']
  %s0 = inlined_call_operand.hbm [shape: f32[8,256], index: 0, kind: input, shape index: {}]
  %s1 = inlined_call_operand.hbm [shape: bf16[512,512], index: 1, kind: input, shape index: {}]
  %s2 = inlined_call_operand.hbm [shape: bf16[1680,256], index: 2, kind: input, shape index: {}]
  %s3 = inlined_call_operand.hbm [shape: f32[10,512], index: 3, kind: input, shape index: {}]
  %s4 = inlined_call_operand.hbm [shape: f32[8,8], index: 4, kind: output, shape index: {0}]
  %s5 = inlined_call_operand.hbm [shape: f32[8,256], index: 5, kind: output, shape index: {1}]
  %6 = xla_tuple %s4, %s5
  %s7 = sld [smem:[#allocation0]]
  $region50: #{tpu_custom_call.1} parent=0
    _
  %s9 = ssub.s32 1, %s7
  %s10 = scalar_select 0, %s9, %s7
  $region1: #{tpu_custom_call.1} parent=0
    #allocation2 [shape = 'u8[8192]{0}', space=vmem, size = 0x2000, scoped, tag = 'input window, operand 0, single buffered']
    #allocation3 [shape = 's32[1]{0}', space=sflag, size = 0x4, scoped, tag = 'scoped memory for tpu_custom_call.1']
    #allocation4 [shape = 's32[1]{0}', space=sflag, size = 0x4, scoped, tag = 'scoped memory for tpu_custom_call.1']
    #allocation5 [shape = 'u8[524288]{0}', space=vmem, size = 0x80000, scoped, tag = 'input window, operand 1, single buffered']
    #allocation6 [shape = 's32[1]{0}', space=sflag, size = 0x4, scoped, tag = 'scoped memory for tpu_custom_call.1']
    #allocation7 [shape = 'u8[860160]{0}', space=vmem, size = 0xd2000, scoped, tag = 'input window, operand 2, single buffered']
    #allocation8 [shape = 'u8[32768]{0}', space=vmem, size = 0x8000, scoped, tag = 'input window, operand 3, single buffered']
    #allocation9 [shape = 's32[1]{0}', space=sflag, size = 0x4, scoped, tag = 'scoped memory for tpu_custom_call.1']
    #allocation10 [shape = 'u8[4096]{0}', space=vmem, size = 0x1000, scoped, tag = 'output window, operand 0, single buffered']
    #allocation11 [shape = 'u8[8192]{0}', space=vmem, size = 0x2000, scoped, tag = 'output window, operand 1, single buffered']
    #allocation12 [shape = 's32[1]{0}', space=sflag, size = 0x4, scoped, tag = 'scoped memory for tpu_custom_call.1']
    %11 = vsyncpa [#allocation3], 0
    %12 = vsyncpa [#allocation6], 0
    %13 = vsyncpa [#allocation9], 0
    %14 = vsyncpa [#allocation4], 0
    %15 = vsyncpa [#allocation12], 0
    // Predicated region
    $region2: #{tpu_custom_call.1} parent=1 // pred_check
      _
    $region3: #{tpu_custom_call.1} parent=1 // pred_check_branch
      %17 = sbr.rel (0) target = $region5
    $region4: #{tpu_custom_call.1} parent=1 // pred_region
      %s19 = ssub.s32 256, 256
      %20 = vsyncadd [#allocation3], %s19
      %s22 = sshll.u32 [#allocation2], 4
      %s23 = int_to_ptr.vmem [resolvable:$true] %s22
      %25 = dma.hbm_to_vmem [thread:$0]  %s0, 256, %s23, [#allocation3]
    $region5: #{tpu_custom_call.1} parent=1 // pred_fallthru
      _
    // Predicated region
    $region6: #{tpu_custom_call.1} parent=1 // pred_check
      _
    $region7: #{tpu_custom_call.1} parent=1 // pred_check_branch
      %27 = sbr.rel (0) target = $region9
    $region8: #{tpu_custom_call.1} parent=1 // pred_region
      %s29 = ssub.s32 16384, 16384
      %30 = vsyncadd [#allocation6], %s29
      %s31 = sshll.u32 [#allocation5], 4
      %s32 = int_to_ptr.vmem [resolvable:$true] %s31
      %37 = dma.hbm_to_vmem [thread:$0]  %s1, 16384, %s32, [#allocation6], 256, 256, 16
    $region9: #{tpu_custom_call.1} parent=1 // pred_fallthru
      _
    // Predicated region
    $region10: #{tpu_custom_call.1} parent=1 // pred_check
      _
    $region11: #{tpu_custom_call.1} parent=1 // pred_check_branch
      %39 = sbr.rel (0) target = $region13
    $region12: #{tpu_custom_call.1} parent=1 // pred_region
      %s41 = ssub.s32 26880, 26880
      %42 = vsyncadd [#allocation6], %s41
      %s43 = sshll.u32 [#allocation7], 4
      %s44 = int_to_ptr.vmem [resolvable:$true] %s43
      %49 = dma.hbm_to_vmem [thread:$0]  %s2, 26880, %s44, [#allocation6], 128, 128, 8
    $region13: #{tpu_custom_call.1} parent=1 // pred_fallthru
      _
    // Predicated region
    $region14: #{tpu_custom_call.1} parent=1 // pred_check
      _
    $region15: #{tpu_custom_call.1} parent=1 // pred_check_branch
      %51 = sbr.rel (0) target = $region17
    $region16: #{tpu_custom_call.1} parent=1 // pred_region
      %s53 = ssub.s32 1024, 1024
      %54 = vsyncadd [#allocation9], %s53
      %s55 = sshll.u32 [#allocation8], 4
      %s56 = int_to_ptr.vmem [resolvable:$true] %s55
      %61 = dma.hbm_to_vmem [thread:$0]  %s3, 1024, %s56, [#allocation9], 512, 512, 32
    $region17: #{tpu_custom_call.1} parent=1 // pred_fallthru
      _
    // Predicated region
    $region18: #{tpu_custom_call.1} parent=1 // pred_check
      _
    $region19: #{tpu_custom_call.1} parent=1 // pred_check_branch
      %63 = sbr.rel (0) target = $region21
    $region20: #{tpu_custom_call.1} parent=1 // pred_region
      %64 = dma.done [#allocation3], 256
    $region21: #{tpu_custom_call.1} parent=1 // pred_fallthru
      _
    // Predicated region
    $region22: #{tpu_custom_call.1} parent=1 // pred_check
      _
    $region23: #{tpu_custom_call.1} parent=1 // pred_check_branch
      %66 = sbr.rel (0) target = $region25
    $region24: #{tpu_custom_call.1} parent=1 // pred_region
      %67 = dma.done [#allocation6], 16384
    $region25: #{tpu_custom_call.1} parent=1 // pred_fallthru
      _
    // Predicated region
    $region26: #{tpu_custom_call.1} parent=1 // pred_check
      _
    $region27: #{tpu_custom_call.1} parent=1 // pred_check_branch
      %69 = sbr.rel (0) target = $region29
    $region28: #{tpu_custom_call.1} parent=1 // pred_region
      %70 = dma.done [#allocation6], 26880
    $region29: #{tpu_custom_call.1} parent=1 // pred_fallthru
      _
    // Predicated region
    $region30: #{tpu_custom_call.1} parent=1 // pred_check
      _
    $region31: #{tpu_custom_call.1} parent=1 // pred_check_branch
      %72 = sbr.rel (0) target = $region33
    $region32: #{tpu_custom_call.1} parent=1 // pred_region
      %73 = dma.done [#allocation9], 1024
    $region33: #{tpu_custom_call.1} parent=1 // pred_fallthru
      _
    %v75 = vld [vmem:[#allocation2] sm:$0xff]
    %v76 = vld [vmem:[#allocation2 + $0x8] sm:$0xff]
    %v77 = vld [vmem:[#allocation5] sm:$0xff]
    %v78 = vld [vmem:[#allocation5 + $0x8] sm:$0xff]
    %v79 = vld [vmem:[#allocation5 + $0x10] sm:$0xff]
    %v80 = vld [vmem:[#allocation5 + $0x18] sm:$0xff]
    %v81 = vld [vmem:[#allocation5 + $0x20] sm:$0xff]
    %v82 = vld [vmem:[#allocation5 + $0x28] sm:$0xff]
    %v83 = vld [vmem:[#allocation5 + $0x30] sm:$0xff]
    %v84 = vld [vmem:[#allocation5 + $0x38] sm:$0xff]
    %v85 = vld [vmem:[#allocation5 + $0x40] sm:$0xff]
    %v86 = vld [vmem:[#allocation5 + $0x48] sm:$0xff]
    %v87 = vld [vmem:[#allocation5 + $0x50] sm:$0xff]
    %v88 = vld [vmem:[#allocation5 + $0x58] sm:$0xff]
    %v89 = vld [vmem:[#allocation5 + $0x60] sm:$0xff]
    %v90 = vld [vmem:[#allocation5 + $0x68] sm:$0xff]
    %v91 = vld [vmem:[#allocation5 + $0x70] sm:$0xff]
    %v92 = vld [vmem:[#allocation5 + $0x78] sm:$0xff]
    %v93 = vld [vmem:[#allocation5 + $0x80] sm:$0xff]
    %v94 = vld [vmem:[#allocation5 + $0x88] sm:$0xff]
    %v95 = vld [vmem:[#allocation5 + $0x90] sm:$0xff]
    %v96 = vld [vmem:[#allocation5 + $0x98] sm:$0xff]
    %v97 = vld [vmem:[#allocation5 + $0xa0] sm:$0xff]
    %v98 = vld [vmem:[#allocation5 + $0xa8] sm:$0xff]
    %v99 = vld [vmem:[#allocation5 + $0xb0] sm:$0xff]
    %v100 = vld [vmem:[#allocation5 + $0xb8] sm:$0xff]
    %v101 = vld [vmem:[#allocation5 + $0xc0] sm:$0xff]
    %v102 = vld [vmem:[#allocation5 + $0xc8] sm:$0xff]
    %v103 = vld [vmem:[#allocation5 + $0xd0] sm:$0xff]
    %v104 = vld [vmem:[#allocation5 + $0xd8] sm:$0xff]
    %v105 = vld [vmem:[#allocation5 + $0xe0] sm:$0xff]
    %v106 = vld [vmem:[#allocation5 + $0xe8] sm:$0xff]
    %v107 = vld [vmem:[#allocation5 + $0xf0] sm:$0xff]
    %v108 = vld [vmem:[#allocation5 + $0xf8] sm:$0xff]
    %v109 = vld [vmem:[#allocation5 + $0x100] sm:$0xff]
    %v110 = vld [vmem:[#allocation5 + $0x108] sm:$0xff]
    %v111 = vld [vmem:[#allocation5 + $0x110] sm:$0xff]
    %v112 = vld [vmem:[#allocation5 + $0x118] sm:$0xff]
    %v113 = vld [vmem:[#allocation5 + $0x120] sm:$0xff]
    %v114 = vld [vmem:[#allocation5 + $0x128] sm:$0xff]
    %v115 = vld [vmem:[#allocation5 + $0x130] sm:$0xff]
    %v116 = vld [vmem:[#allocation5 + $0x138] sm:$0xff]
    %v117 = vld [vmem:[#allocation5 + $0x140] sm:$0xff]
    %v118 = vld [vmem:[#allocation5 + $0x148] sm:$0xff]
    %v119 = vld [vmem:[#allocation5 + $0x150] sm:$0xff]
    %v120 = vld [vmem:[#allocation5 + $0x158] sm:$0xff]
    %v121 = vld [vmem:[#allocation5 + $0x160] sm:$0xff]
    %v122 = vld [vmem:[#allocation5 + $0x168] sm:$0xff]
    %v123 = vld [vmem:[#allocation5 + $0x170] sm:$0xff]
    %v124 = vld [vmem:[#allocation5 + $0x178] sm:$0xff]
    %v125 = vld [vmem:[#allocation5 + $0x180] sm:$0xff]
    %v126 = vld [vmem:[#allocation5 + $0x188] sm:$0xff]
    %v127 = vld [vmem:[#allocation5 + $0x190] sm:$0xff]
    %v128 = vld [vmem:[#allocation5 + $0x198] sm:$0xff]
    %v129 = vld [vmem:[#allocation5 + $0x1a0] sm:$0xff]
    %v130 = vld [vmem:[#allocation5 + $0x1a8] sm:$0xff]
    %v131 = vld [vmem:[#allocation5 + $0x1b0] sm:$0xff]
    %v132 = vld [vmem:[#allocation5 + $0x1b8] sm:$0xff]
    %v133 = vld [vmem:[#allocation5 + $0x1c0] sm:$0xff]
    %v134 = vld [vmem:[#allocation5 + $0x1c8] sm:$0xff]
    %v135 = vld [vmem:[#allocation5 + $0x1d0] sm:$0xff]
    %v136 = vld [vmem:[#allocation5 + $0x1d8] sm:$0xff]
    %v137 = vld [vmem:[#allocation5 + $0x1e0] sm:$0xff]
    %v138 = vld [vmem:[#allocation5 + $0x1e8] sm:$0xff]
    %v139 = vld [vmem:[#allocation5 + $0x1f0] sm:$0xff]
    %v140 = vld [vmem:[#allocation5 + $0x1f8] sm:$0xff]
    %v141 = vld [vmem:[#allocation8] ss:$8 sm:$0xf]
    %v142 = vpack.c.bf16 %v75, %v75
    %v143 = vpack.c.bf16 %v76, %v76
    %v145 = vlaneseq
    %v146 = vshrl.u32 %v145, 7
    %v147 = vsub.s32 0, %v146
    %v148 = vrot.slane %v141, %v147
    %v149 = vlaneseq
    %v150 = vshrl.u32 %v149, 7
    %v151 = vsub.s32 1, %v150
    %v152 = vrot.slane %v141, %v151
    %v153 = vlaneseq
    %v154 = vshrl.u32 %v153, 7
    %v155 = vsub.s32 2, %v154
    %v156 = vrot.slane %v141, %v155
    %v157 = vlaneseq
    %v158 = vshrl.u32 %v157, 7
    %v159 = vsub.s32 3, %v158
    %v160 = vrot.slane %v141, %v159
    %v229 = vunpack.c.l.b16 %v77
    %v230 = vunpack.c.h.b16 %v77
    %v231 = vunpack.c.l.b16 %v78
    %v232 = vunpack.c.h.b16 %v78
    %v233 = vunpack.c.l.b16 %v79
    %v234 = vunpack.c.h.b16 %v79
    %v235 = vunpack.c.l.b16 %v80
    %v236 = vunpack.c.h.b16 %v80
    %v237 = vunpack.c.l.b16 %v81
    %v238 = vunpack.c.h.b16 %v81
    %v239 = vunpack.c.l.b16 %v82
    %v240 = vunpack.c.h.b16 %v82
    %v241 = vunpack.c.l.b16 %v83
    %v242 = vunpack.c.h.b16 %v83
    %v243 = vunpack.c.l.b16 %v84
    %v244 = vunpack.c.h.b16 %v84
    %v245 = vunpack.c.l.b16 %v85
    %v246 = vunpack.c.h.b16 %v85
    %v247 = vunpack.c.l.b16 %v86
    %v248 = vunpack.c.h.b16 %v86
    %v249 = vunpack.c.l.b16 %v87
    %v250 = vunpack.c.h.b16 %v87
    %v251 = vunpack.c.l.b16 %v88
    %v252 = vunpack.c.h.b16 %v88
    %v253 = vunpack.c.l.b16 %v89
    %v254 = vunpack.c.h.b16 %v89
    %v255 = vunpack.c.l.b16 %v90
    %v256 = vunpack.c.h.b16 %v90
    %v257 = vunpack.c.l.b16 %v91
    %v258 = vunpack.c.h.b16 %v91
    %v259 = vunpack.c.l.b16 %v92
    %v260 = vunpack.c.h.b16 %v92
    %v261 = vunpack.c.l.b16 %v93
    %v262 = vunpack.c.h.b16 %v93
    %v263 = vunpack.c.l.b16 %v94
    %v264 = vunpack.c.h.b16 %v94
    %v265 = vunpack.c.l.b16 %v95
    %v266 = vunpack.c.h.b16 %v95
    %v267 = vunpack.c.l.b16 %v96
    %v268 = vunpack.c.h.b16 %v96
    %v269 = vunpack.c.l.b16 %v97
    %v270 = vunpack.c.h.b16 %v97
    %v271 = vunpack.c.l.b16 %v98
    %v272 = vunpack.c.h.b16 %v98
    %v273 = vunpack.c.l.b16 %v99
    %v274 = vunpack.c.h.b16 %v99
    %v275 = vunpack.c.l.b16 %v100
    %v276 = vunpack.c.h.b16 %v100
    %v277 = vunpack.c.l.b16 %v101
    %v278 = vunpack.c.h.b16 %v101
    %v279 = vunpack.c.l.b16 %v102
    %v280 = vunpack.c.h.b16 %v102
    %v281 = vunpack.c.l.b16 %v103
    %v282 = vunpack.c.h.b16 %v103
    %v283 = vunpack.c.l.b16 %v104
    %v284 = vunpack.c.h.b16 %v104
    %v285 = vunpack.c.l.b16 %v105
    %v286 = vunpack.c.h.b16 %v105
    %v287 = vunpack.c.l.b16 %v106
    %v288 = vunpack.c.h.b16 %v106
    %v289 = vunpack.c.l.b16 %v107
    %v290 = vunpack.c.h.b16 %v107
    %v291 = vunpack.c.l.b16 %v108
    %v292 = vunpack.c.h.b16 %v108
    %v293 = vunpack.c.l.b16 %v109
    %v294 = vunpack.c.h.b16 %v109
    %v295 = vunpack.c.l.b16 %v110
    %v296 = vunpack.c.h.b16 %v110
    %v297 = vunpack.c.l.b16 %v111
    %v298 = vunpack.c.h.b16 %v111
    %v299 = vunpack.c.l.b16 %v112
    %v300 = vunpack.c.h.b16 %v112
    %v301 = vunpack.c.l.b16 %v113
    %v302 = vunpack.c.h.b16 %v113
    %v303 = vunpack.c.l.b16 %v114
    %v304 = vunpack.c.h.b16 %v114
    %v305 = vunpack.c.l.b16 %v115
    %v306 = vunpack.c.h.b16 %v115
    %v307 = vunpack.c.l.b16 %v116
    %v308 = vunpack.c.h.b16 %v116
    %v309 = vunpack.c.l.b16 %v117
    %v310 = vunpack.c.h.b16 %v117
    %v311 = vunpack.c.l.b16 %v118
    %v312 = vunpack.c.h.b16 %v118
    %v313 = vunpack.c.l.b16 %v119
    %v314 = vunpack.c.h.b16 %v119
    %v315 = vunpack.c.l.b16 %v120
    %v316 = vunpack.c.h.b16 %v120
    %v317 = vunpack.c.l.b16 %v121
    %v318 = vunpack.c.h.b16 %v121
    %v319 = vunpack.c.l.b16 %v122
    %v320 = vunpack.c.h.b16 %v122
    %v321 = vunpack.c.l.b16 %v123
    %v322 = vunpack.c.h.b16 %v123
    %v323 = vunpack.c.l.b16 %v124
    %v324 = vunpack.c.h.b16 %v124
    %v325 = vunpack.c.l.b16 %v125
    %v326 = vunpack.c.h.b16 %v125
    %v327 = vunpack.c.l.b16 %v126
    %v328 = vunpack.c.h.b16 %v126
    %v329 = vunpack.c.l.b16 %v127
    %v330 = vunpack.c.h.b16 %v127
    %v331 = vunpack.c.l.b16 %v128
    %v332 = vunpack.c.h.b16 %v128
    %v333 = vunpack.c.l.b16 %v129
    %v334 = vunpack.c.h.b16 %v129
    %v335 = vunpack.c.l.b16 %v130
    %v336 = vunpack.c.h.b16 %v130
    %v337 = vunpack.c.l.b16 %v131
    %v338 = vunpack.c.h.b16 %v131
    %v339 = vunpack.c.l.b16 %v132
    %v340 = vunpack.c.h.b16 %v132
    %v341 = vunpack.c.l.b16 %v133
    %v342 = vunpack.c.h.b16 %v133
    %v343 = vunpack.c.l.b16 %v134
    %v344 = vunpack.c.h.b16 %v134
    %v345 = vunpack.c.l.b16 %v135
    %v346 = vunpack.c.h.b16 %v135
    %v347 = vunpack.c.l.b16 %v136
    %v348 = vunpack.c.h.b16 %v136
    %v349 = vunpack.c.l.b16 %v137
    %v350 = vunpack.c.h.b16 %v137
    %v351 = vunpack.c.l.b16 %v138
    %v352 = vunpack.c.h.b16 %v138
    %v353 = vunpack.c.l.b16 %v139
    %v354 = vunpack.c.h.b16 %v139
    %v355 = vunpack.c.l.b16 %v140
    %v356 = vunpack.c.h.b16 %v140
    %v357 = vpack.c.b16 %v233, %v229
    %v358 = vpack.c.b16 %v234, %v230
    %v359 = vpack.c.b16 %v235, %v231
    %v360 = vpack.c.b16 %v236, %v232
    %v361 = vpack.c.b16 %v241, %v237
    %v362 = vpack.c.b16 %v242, %v238
    %v363 = vpack.c.b16 %v243, %v239
    %v364 = vpack.c.b16 %v244, %v240
    %v365 = vpack.c.b16 %v249, %v245
    %v366 = vpack.c.b16 %v250, %v246
    %v367 = vpack.c.b16 %v251, %v247
    %v368 = vpack.c.b16 %v252, %v248
    %v369 = vpack.c.b16 %v257, %v253
    %v370 = vpack.c.b16 %v258, %v254
    %v371 = vpack.c.b16 %v259, %v255
    %v372 = vpack.c.b16 %v260, %v256
    %v373 = vpack.c.b16 %v265, %v261
    %v374 = vpack.c.b16 %v266, %v262
    %v375 = vpack.c.b16 %v267, %v263
    %v376 = vpack.c.b16 %v268, %v264
    %v377 = vpack.c.b16 %v273, %v269
    %v378 = vpack.c.b16 %v274, %v270
    %v379 = vpack.c.b16 %v275, %v271
    %v380 = vpack.c.b16 %v276, %v272
    %v381 = vpack.c.b16 %v281, %v277
    %v382 = vpack.c.b16 %v282, %v278
    %v383 = vpack.c.b16 %v283, %v279
    %v384 = vpack.c.b16 %v284, %v280
    %v385 = vpack.c.b16 %v289, %v285
    %v386 = vpack.c.b16 %v290, %v286
    %v387 = vpack.c.b16 %v291, %v287
    %v388 = vpack.c.b16 %v292, %v288
    %v389 = vpack.c.b16 %v297, %v293
    %v390 = vpack.c.b16 %v298, %v294
    %v391 = vpack.c.b16 %v299, %v295
    %v392 = vpack.c.b16 %v300, %v296
    %v393 = vpack.c.b16 %v305, %v301
    %v394 = vpack.c.b16 %v306, %v302
    %v395 = vpack.c.b16 %v307, %v303
    %v396 = vpack.c.b16 %v308, %v304
    %v397 = vpack.c.b16 %v313, %v309
    %v398 = vpack.c.b16 %v314, %v310
    %v399 = vpack.c.b16 %v315, %v311
    %v400 = vpack.c.b16 %v316, %v312
    %v401 = vpack.c.b16 %v321, %v317
    %v402 = vpack.c.b16 %v322, %v318
    %v403 = vpack.c.b16 %v323, %v319
    %v404 = vpack.c.b16 %v324, %v320
    %v405 = vpack.c.b16 %v329, %v325
    %v406 = vpack.c.b16 %v330, %v326
    %v407 = vpack.c.b16 %v331, %v327
    %v408 = vpack.c.b16 %v332, %v328
    %v409 = vpack.c.b16 %v337, %v333
    %v410 = vpack.c.b16 %v338, %v334
    %v411 = vpack.c.b16 %v339, %v335
    %v412 = vpack.c.b16 %v340, %v336
    %v413 = vpack.c.b16 %v345, %v341
    %v414 = vpack.c.b16 %v346, %v342
    %v415 = vpack.c.b16 %v347, %v343
    %v416 = vpack.c.b16 %v348, %v344
    %v417 = vpack.c.b16 %v353, %v349
    %v418 = vpack.c.b16 %v354, %v350
    %v419 = vpack.c.b16 %v355, %v351
    %v420 = vpack.c.b16 %v356, %v352
    %485 = vmatprep.subr.bf16.mxu0 %v358
    %486 = vmatpush1.bf16.msra.mxu0 %v357
    %487 = vmatprep.subr.bf16.mxu0 %v362
    %488 = vmatpush1.bf16.msra.mxu0 %v361
    %489 = vmatprep.subr.bf16.mxu0 %v366
    %490 = vmatpush1.bf16.msra.mxu0 %v365
    %491 = vmatprep.subr.bf16.mxu0 %v370
    %492 = vmatpush1.bf16.msra.mxu0 %v369
    %493 = vmatprep.subr.bf16.mxu0 %v374
    %494 = vmatpush1.bf16.msra.mxu0 %v373
    %495 = vmatprep.subr.bf16.mxu0 %v378
    %496 = vmatpush1.bf16.msra.mxu0 %v377
    %497 = vmatprep.subr.bf16.mxu0 %v382
    %498 = vmatpush1.bf16.msra.mxu0 %v381
    %499 = vmatprep.subr.bf16.mxu0 %v386
    %500 = vmatpush1.bf16.msra.mxu0 %v385
    %501 = vmatprep.subr.bf16.mxu0 %v390
    %502 = vmatpush1.bf16.msra.mxu0 %v389
    %503 = vmatprep.subr.bf16.mxu0 %v394
    %504 = vmatpush1.bf16.msra.mxu0 %v393
    %505 = vmatprep.subr.bf16.mxu0 %v398
    %506 = vmatpush1.bf16.msra.mxu0 %v397
    %507 = vmatprep.subr.bf16.mxu0 %v402
    %508 = vmatpush1.bf16.msra.mxu0 %v401
    %509 = vmatprep.subr.bf16.mxu0 %v406
    %510 = vmatpush1.bf16.msra.mxu0 %v405
    %511 = vmatprep.subr.bf16.mxu0 %v410
    %512 = vmatpush1.bf16.msra.mxu0 %v409
    %513 = vmatprep.subr.bf16.mxu0 %v414
    %514 = vmatpush1.bf16.msra.mxu0 %v413
    %515 = vmatprep.subr.bf16.mxu0 %v418
    %516 = vmatpush1.bf16.msra.mxu0 %v417
    %517 = vmatprep.mubr.bf16.mxu0 %v143
    %518 = vmatmul.mubr.bf16.gmra.mrb[0].mxu0 %v142
    %v519 = vpop.f32.mrb[0].mxu0
    %v520 = vadd.f32 %v148, %v519
    %v521 = vpop.f32.mrb[0].mxu0
    %v522 = vadd.f32 %v152, %v521
    %v523 = vpop.f32.mrb[0].mxu0
    %v524 = vpop.f32.mrb[0].mxu0
    %525 = vdwg.mxu0
    %526 = vmatprep.subr.bf16.mxu0 %v360
    %527 = vmatpush1.bf16.msra.mxu0 %v359
    %528 = vmatprep.subr.bf16.mxu0 %v364
    %529 = vmatpush1.bf16.msra.mxu0 %v363
    %530 = vmatprep.subr.bf16.mxu0 %v368
    %531 = vmatpush1.bf16.msra.mxu0 %v367
    %532 = vmatprep.subr.bf16.mxu0 %v372
    %533 = vmatpush1.bf16.msra.mxu0 %v371
    %534 = vmatprep.subr.bf16.mxu0 %v376
    %535 = vmatpush1.bf16.msra.mxu0 %v375
    %536 = vmatprep.subr.bf16.mxu0 %v380
    %537 = vmatpush1.bf16.msra.mxu0 %v379
    %538 = vmatprep.subr.bf16.mxu0 %v384
    %539 = vmatpush1.bf16.msra.mxu0 %v383
    %540 = vmatprep.subr.bf16.mxu0 %v388
    %541 = vmatpush1.bf16.msra.mxu0 %v387
    %542 = vmatprep.subr.bf16.mxu0 %v392
    %543 = vmatpush1.bf16.msra.mxu0 %v391
    %544 = vmatprep.subr.bf16.mxu0 %v396
    %545 = vmatpush1.bf16.msra.mxu0 %v395
    %546 = vmatprep.subr.bf16.mxu0 %v400
    %547 = vmatpush1.bf16.msra.mxu0 %v399
    %548 = vmatprep.subr.bf16.mxu0 %v404
    %549 = vmatpush1.bf16.msra.mxu0 %v403
    %550 = vmatprep.subr.bf16.mxu0 %v408
    %551 = vmatpush1.bf16.msra.mxu0 %v407
    %552 = vmatprep.subr.bf16.mxu0 %v412
    %553 = vmatpush1.bf16.msra.mxu0 %v411
    %554 = vmatprep.subr.bf16.mxu0 %v416
    %555 = vmatpush1.bf16.msra.mxu0 %v415
    %556 = vmatprep.subr.bf16.mxu0 %v420
    %557 = vmatpush1.bf16.msra.mxu0 %v419
    %558 = vmatprep.mubr.bf16.mxu0 %v143
    %559 = vmatmul.mubr.bf16.gmra.mrb[0].mxu0 %v142
    %v560 = vpop.f32.mrb[0].mxu0
    %v561 = vadd.f32 %v156, %v560
    %v562 = vpop.f32.mrb[0].mxu0
    %v563 = vadd.f32 %v160, %v562
    %v564 = vpop.f32.mrb[0].mxu0
    %v565 = vpop.f32.mrb[0].mxu0
    %566 = vdwg.mxu0
    %v567 = vmax.f32 %v520, 0.0
    %v568 = vmax.f32 %v522, 0.0
    %v569 = vmax.f32 %v561, 0.0
    %v570 = vmax.f32 %v563, 0.0
    %v571 = vld [vmem:[#allocation7] sm:$0xff]
    %v572 = vld [vmem:[#allocation7 + $0x8] sm:$0xff]
    %v573 = vld [vmem:[#allocation7 + $0x10] sm:$0xff]
    %v574 = vld [vmem:[#allocation7 + $0x18] sm:$0xff]
    %v575 = vld [vmem:[#allocation7 + $0x20] sm:$0xff]
    %v576 = vld [vmem:[#allocation7 + $0x28] sm:$0xff]
    %v577 = vld [vmem:[#allocation7 + $0x30] sm:$0xff]
    %v578 = vld [vmem:[#allocation7 + $0x38] sm:$0xff]
    %v579 = vld [vmem:[#allocation7 + $0x40] sm:$0xff]
    %v580 = vld [vmem:[#allocation7 + $0x48] sm:$0xff]
    %v581 = vld [vmem:[#allocation7 + $0x50] sm:$0xff]
    %v582 = vld [vmem:[#allocation7 + $0x58] sm:$0xff]
    %v583 = vld [vmem:[#allocation7 + $0x60] sm:$0xff]
    %v584 = vld [vmem:[#allocation7 + $0x68] sm:$0xff]
    %v585 = vld [vmem:[#allocation7 + $0x70] sm:$0xff]
    %v586 = vld [vmem:[#allocation7 + $0x78] sm:$0xff]
    %v587 = vld [vmem:[#allocation7 + $0x80] sm:$0xff]
    %v588 = vld [vmem:[#allocation7 + $0x88] sm:$0xff]
    %v589 = vld [vmem:[#allocation7 + $0x90] sm:$0xff]
    %v590 = vld [vmem:[#allocation7 + $0x98] sm:$0xff]
    %v591 = vld [vmem:[#allocation7 + $0xa0] sm:$0xff]
    %v592 = vld [vmem:[#allocation7 + $0xa8] sm:$0xff]
    %v593 = vld [vmem:[#allocation7 + $0xb0] sm:$0xff]
    %v594 = vld [vmem:[#allocation7 + $0xb8] sm:$0xff]
    %v595 = vld [vmem:[#allocation7 + $0xc0] sm:$0xff]
    %v596 = vld [vmem:[#allocation7 + $0xc8] sm:$0xff]
    %v597 = vld [vmem:[#allocation7 + $0xd0] sm:$0xff]
    %v598 = vld [vmem:[#allocation7 + $0xd8] sm:$0xff]
    %v599 = vld [vmem:[#allocation7 + $0xe0] sm:$0xff]
    %v600 = vld [vmem:[#allocation7 + $0xe8] sm:$0xff]
    %v601 = vld [vmem:[#allocation7 + $0xf0] sm:$0xff]
    %v602 = vld [vmem:[#allocation7 + $0xf8] sm:$0xff]
    %v603 = vld [vmem:[#allocation7 + $0x100] sm:$0xff]
    %v604 = vld [vmem:[#allocation7 + $0x108] sm:$0xff]
    %v605 = vld [vmem:[#allocation7 + $0x110] sm:$0xff]
    %v606 = vld [vmem:[#allocation7 + $0x118] sm:$0xff]
    %v607 = vld [vmem:[#allocation7 + $0x120] sm:$0xff]
    %v608 = vld [vmem:[#allocation7 + $0x128] sm:$0xff]
    %v609 = vld [vmem:[#allocation7 + $0x130] sm:$0xff]
    %v610 = vld [vmem:[#allocation7 + $0x138] sm:$0xff]
    %v611 = vld [vmem:[#allocation7 + $0x140] sm:$0xff]
    %v612 = vld [vmem:[#allocation7 + $0x148] sm:$0xff]
    %v613 = vld [vmem:[#allocation7 + $0x150] sm:$0xff]
    %v614 = vld [vmem:[#allocation7 + $0x158] sm:$0xff]
    %v615 = vld [vmem:[#allocation7 + $0x160] sm:$0xff]
    %v616 = vld [vmem:[#allocation7 + $0x168] sm:$0xff]
    %v617 = vld [vmem:[#allocation7 + $0x170] sm:$0xff]
    %v618 = vld [vmem:[#allocation7 + $0x178] sm:$0xff]
    %v619 = vld [vmem:[#allocation7 + $0x180] sm:$0xff]
    %v620 = vld [vmem:[#allocation7 + $0x188] sm:$0xff]
    %v621 = vld [vmem:[#allocation7 + $0x190] sm:$0xff]
    %v622 = vld [vmem:[#allocation7 + $0x198] sm:$0xff]
    %v623 = vld [vmem:[#allocation7 + $0x1a0] sm:$0xff]
    %v624 = vld [vmem:[#allocation7 + $0x1a8] sm:$0xff]
    %v625 = vld [vmem:[#allocation7 + $0x1b0] sm:$0xff]
    %v626 = vld [vmem:[#allocation7 + $0x1b8] sm:$0xff]
    %v627 = vld [vmem:[#allocation7 + $0x1c0] sm:$0xff]
    %v628 = vld [vmem:[#allocation7 + $0x1c8] sm:$0xff]
    %v629 = vld [vmem:[#allocation7 + $0x1d0] sm:$0xff]
    %v630 = vld [vmem:[#allocation7 + $0x1d8] sm:$0xff]
    %v631 = vld [vmem:[#allocation7 + $0x1e0] sm:$0xff]
    %v632 = vld [vmem:[#allocation7 + $0x1e8] sm:$0xff]
    %v633 = vld [vmem:[#allocation7 + $0x1f0] sm:$0xff]
    %v634 = vld [vmem:[#allocation7 + $0x1f8] sm:$0xff]
    %s635 = scalar_lea.vmem [#allocation8], 1
    %v636 = vld [vmem:[%s635] ss:$8 sm:$0x3]
    %v637 = vpack.c.bf16 %v567, %v567
    %v638 = vpack.c.bf16 %v568, %v568
    %v639 = vpack.c.bf16 %v569, %v569
    %v640 = vpack.c.bf16 %v570, %v570
    %v642 = vlaneseq
    %v643 = vshrl.u32 %v642, 7
    %v644 = vsub.s32 0, %v643
    %v645 = vrot.slane %v636, %v644
    %v646 = vlaneseq
    %v647 = vshrl.u32 %v646, 7
    %v648 = vsub.s32 1, %v647
    %v649 = vrot.slane %v636, %v648
    %v716 = vunpack.c.l.b16 %v571
    %v717 = vunpack.c.h.b16 %v571
    %v718 = vunpack.c.l.b16 %v572
    %v719 = vunpack.c.h.b16 %v572
    %v720 = vunpack.c.l.b16 %v573
    %v721 = vunpack.c.h.b16 %v573
    %v722 = vunpack.c.l.b16 %v574
    %v723 = vunpack.c.h.b16 %v574
    %v724 = vunpack.c.l.b16 %v575
    %v725 = vunpack.c.h.b16 %v575
    %v726 = vunpack.c.l.b16 %v576
    %v727 = vunpack.c.h.b16 %v576
    %v728 = vunpack.c.l.b16 %v577
    %v729 = vunpack.c.h.b16 %v577
    %v730 = vunpack.c.l.b16 %v578
    %v731 = vunpack.c.h.b16 %v578
    %v732 = vunpack.c.l.b16 %v579
    %v733 = vunpack.c.h.b16 %v579
    %v734 = vunpack.c.l.b16 %v580
    %v735 = vunpack.c.h.b16 %v580
    %v736 = vunpack.c.l.b16 %v581
    %v737 = vunpack.c.h.b16 %v581
    %v738 = vunpack.c.l.b16 %v582
    %v739 = vunpack.c.h.b16 %v582
    %v740 = vunpack.c.l.b16 %v583
    %v741 = vunpack.c.h.b16 %v583
    %v742 = vunpack.c.l.b16 %v584
    %v743 = vunpack.c.h.b16 %v584
    %v744 = vunpack.c.l.b16 %v585
    %v745 = vunpack.c.h.b16 %v585
    %v746 = vunpack.c.l.b16 %v586
    %v747 = vunpack.c.h.b16 %v586
    %v748 = vunpack.c.l.b16 %v587
    %v749 = vunpack.c.h.b16 %v587
    %v750 = vunpack.c.l.b16 %v588
    %v751 = vunpack.c.h.b16 %v588
    %v752 = vunpack.c.l.b16 %v589
    %v753 = vunpack.c.h.b16 %v589
    %v754 = vunpack.c.l.b16 %v590
    %v755 = vunpack.c.h.b16 %v590
    %v756 = vunpack.c.l.b16 %v591
    %v757 = vunpack.c.h.b16 %v591
    %v758 = vunpack.c.l.b16 %v592
    %v759 = vunpack.c.h.b16 %v592
    %v760 = vunpack.c.l.b16 %v593
    %v761 = vunpack.c.h.b16 %v593
    %v762 = vunpack.c.l.b16 %v594
    %v763 = vunpack.c.h.b16 %v594
    %v764 = vunpack.c.l.b16 %v595
    %v765 = vunpack.c.h.b16 %v595
    %v766 = vunpack.c.l.b16 %v596
    %v767 = vunpack.c.h.b16 %v596
    %v768 = vunpack.c.l.b16 %v597
    %v769 = vunpack.c.h.b16 %v597
    %v770 = vunpack.c.l.b16 %v598
    %v771 = vunpack.c.h.b16 %v598
    %v772 = vunpack.c.l.b16 %v599
    %v773 = vunpack.c.h.b16 %v599
    %v774 = vunpack.c.l.b16 %v600
    %v775 = vunpack.c.h.b16 %v600
    %v776 = vunpack.c.l.b16 %v601
    %v777 = vunpack.c.h.b16 %v601
    %v778 = vunpack.c.l.b16 %v602
    %v779 = vunpack.c.h.b16 %v602
    %v780 = vunpack.c.l.b16 %v603
    %v781 = vunpack.c.h.b16 %v603
    %v782 = vunpack.c.l.b16 %v604
    %v783 = vunpack.c.h.b16 %v604
    %v784 = vunpack.c.l.b16 %v605
    %v785 = vunpack.c.h.b16 %v605
    %v786 = vunpack.c.l.b16 %v606
    %v787 = vunpack.c.h.b16 %v606
    %v788 = vunpack.c.l.b16 %v607
    %v789 = vunpack.c.h.b16 %v607
    %v790 = vunpack.c.l.b16 %v608
    %v791 = vunpack.c.h.b16 %v608
    %v792 = vunpack.c.l.b16 %v609
    %v793 = vunpack.c.h.b16 %v609
    %v794 = vunpack.c.l.b16 %v610
    %v795 = vunpack.c.h.b16 %v610
    %v796 = vunpack.c.l.b16 %v611
    %v797 = vunpack.c.h.b16 %v611
    %v798 = vunpack.c.l.b16 %v612
    %v799 = vunpack.c.h.b16 %v612
    %v800 = vunpack.c.l.b16 %v613
    %v801 = vunpack.c.h.b16 %v613
    %v802 = vunpack.c.l.b16 %v614
    %v803 = vunpack.c.h.b16 %v614
    %v804 = vunpack.c.l.b16 %v615
    %v805 = vunpack.c.h.b16 %v615
    %v806 = vunpack.c.l.b16 %v616
    %v807 = vunpack.c.h.b16 %v616
    %v808 = vunpack.c.l.b16 %v617
    %v809 = vunpack.c.h.b16 %v617
    %v810 = vunpack.c.l.b16 %v618
    %v811 = vunpack.c.h.b16 %v618
    %v812 = vunpack.c.l.b16 %v619
    %v813 = vunpack.c.h.b16 %v619
    %v814 = vunpack.c.l.b16 %v620
    %v815 = vunpack.c.h.b16 %v620
    %v816 = vunpack.c.l.b16 %v621
    %v817 = vunpack.c.h.b16 %v621
    %v818 = vunpack.c.l.b16 %v622
    %v819 = vunpack.c.h.b16 %v622
    %v820 = vunpack.c.l.b16 %v623
    %v821 = vunpack.c.h.b16 %v623
    %v822 = vunpack.c.l.b16 %v624
    %v823 = vunpack.c.h.b16 %v624
    %v824 = vunpack.c.l.b16 %v625
    %v825 = vunpack.c.h.b16 %v625
    %v826 = vunpack.c.l.b16 %v626
    %v827 = vunpack.c.h.b16 %v626
    %v828 = vunpack.c.l.b16 %v627
    %v829 = vunpack.c.h.b16 %v627
    %v830 = vunpack.c.l.b16 %v628
    %v831 = vunpack.c.h.b16 %v628
    %v832 = vunpack.c.l.b16 %v629
    %v833 = vunpack.c.h.b16 %v629
    %v834 = vunpack.c.l.b16 %v630
    %v835 = vunpack.c.h.b16 %v630
    %v836 = vunpack.c.l.b16 %v631
    %v837 = vunpack.c.h.b16 %v631
    %v838 = vunpack.c.l.b16 %v632
    %v839 = vunpack.c.h.b16 %v632
    %v840 = vunpack.c.l.b16 %v633
    %v841 = vunpack.c.h.b16 %v633
    %v842 = vunpack.c.l.b16 %v634
    %v843 = vunpack.c.h.b16 %v634
    %v844 = vpack.c.b16 %v718, %v716
    %v845 = vpack.c.b16 %v719, %v717
    %v846 = vpack.c.b16 %v722, %v720
    %v847 = vpack.c.b16 %v723, %v721
    %v848 = vpack.c.b16 %v726, %v724
    %v849 = vpack.c.b16 %v727, %v725
    %v850 = vpack.c.b16 %v730, %v728
    %v851 = vpack.c.b16 %v731, %v729
    %v852 = vpack.c.b16 %v734, %v732
    %v853 = vpack.c.b16 %v735, %v733
    %v854 = vpack.c.b16 %v738, %v736
    %v855 = vpack.c.b16 %v739, %v737
    %v856 = vpack.c.b16 %v742, %v740
    %v857 = vpack.c.b16 %v743, %v741
    %v858 = vpack.c.b16 %v746, %v744
    %v859 = vpack.c.b16 %v747, %v745
    %v860 = vpack.c.b16 %v750, %v748
    %v861 = vpack.c.b16 %v751, %v749
    %v862 = vpack.c.b16 %v754, %v752
    %v863 = vpack.c.b16 %v755, %v753
    %v864 = vpack.c.b16 %v758, %v756
    %v865 = vpack.c.b16 %v759, %v757
    %v866 = vpack.c.b16 %v762, %v760
    %v867 = vpack.c.b16 %v763, %v761
    %v868 = vpack.c.b16 %v766, %v764
    %v869 = vpack.c.b16 %v767, %v765
    %v870 = vpack.c.b16 %v770, %v768
    %v871 = vpack.c.b16 %v771, %v769
    %v872 = vpack.c.b16 %v774, %v772
    %v873 = vpack.c.b16 %v775, %v773
    %v874 = vpack.c.b16 %v778, %v776
    %v875 = vpack.c.b16 %v779, %v777
    %v876 = vpack.c.b16 %v782, %v780
    %v877 = vpack.c.b16 %v783, %v781
    %v878 = vpack.c.b16 %v786, %v784
    %v879 = vpack.c.b16 %v787, %v785
    %v880 = vpack.c.b16 %v790, %v788
    %v881 = vpack.c.b16 %v791, %v789
    %v882 = vpack.c.b16 %v794, %v792
    %v883 = vpack.c.b16 %v795, %v793
    %v884 = vpack.c.b16 %v798, %v796
    %v885 = vpack.c.b16 %v799, %v797
    %v886 = vpack.c.b16 %v802, %v800
    %v887 = vpack.c.b16 %v803, %v801
    %v888 = vpack.c.b16 %v806, %v804
    %v889 = vpack.c.b16 %v807, %v805
    %v890 = vpack.c.b16 %v810, %v808
    %v891 = vpack.c.b16 %v811, %v809
    %v892 = vpack.c.b16 %v814, %v812
    %v893 = vpack.c.b16 %v815, %v813
    %v894 = vpack.c.b16 %v818, %v816
    %v895 = vpack.c.b16 %v819, %v817
    %v896 = vpack.c.b16 %v822, %v820
    %v897 = vpack.c.b16 %v823, %v821
    %v898 = vpack.c.b16 %v826, %v824
    %v899 = vpack.c.b16 %v827, %v825
    %v900 = vpack.c.b16 %v830, %v828
    %v901 = vpack.c.b16 %v831, %v829
    %v902 = vpack.c.b16 %v834, %v832
    %v903 = vpack.c.b16 %v835, %v833
    %v904 = vpack.c.b16 %v838, %v836
    %v905 = vpack.c.b16 %v839, %v837
    %v906 = vpack.c.b16 %v842, %v840
    %v907 = vpack.c.b16 %v843, %v841
    %972 = vmatprep.subr.bf16.mxu0 %v845
    %973 = vmatpush1.bf16.msra.mxu0 %v844
    %974 = vmatprep.subr.bf16.mxu0 %v847
    %975 = vmatpush1.bf16.msra.mxu0 %v846
    %976 = vmatprep.subr.bf16.mxu0 %v849
    %977 = vmatpush1.bf16.msra.mxu0 %v848
    %978 = vmatprep.subr.bf16.mxu0 %v851
    %979 = vmatpush1.bf16.msra.mxu0 %v850
    %980 = vmatprep.subr.bf16.mxu0 %v853
    %981 = vmatpush1.bf16.msra.mxu0 %v852
    %982 = vmatprep.subr.bf16.mxu0 %v855
    %983 = vmatpush1.bf16.msra.mxu0 %v854
    %984 = vmatprep.subr.bf16.mxu0 %v857
    %985 = vmatpush1.bf16.msra.mxu0 %v856
    %986 = vmatprep.subr.bf16.mxu0 %v859
    %987 = vmatpush1.bf16.msra.mxu0 %v858
    %988 = vmatprep.subr.bf16.mxu0 %v861
    %989 = vmatpush1.bf16.msra.mxu0 %v860
    %990 = vmatprep.subr.bf16.mxu0 %v863
    %991 = vmatpush1.bf16.msra.mxu0 %v862
    %992 = vmatprep.subr.bf16.mxu0 %v865
    %993 = vmatpush1.bf16.msra.mxu0 %v864
    %994 = vmatprep.subr.bf16.mxu0 %v867
    %995 = vmatpush1.bf16.msra.mxu0 %v866
    %996 = vmatprep.subr.bf16.mxu0 %v869
    %997 = vmatpush1.bf16.msra.mxu0 %v868
    %998 = vmatprep.subr.bf16.mxu0 %v871
    %999 = vmatpush1.bf16.msra.mxu0 %v870
    %1000 = vmatprep.subr.bf16.mxu0 %v873
    %1001 = vmatpush1.bf16.msra.mxu0 %v872
    %1002 = vmatprep.subr.bf16.mxu0 %v875
    %1003 = vmatpush1.bf16.msra.mxu0 %v874
    %1004 = vmatprep.mubr.bf16.mxu0 %v638
    %1005 = vmatmul.mubr.bf16.gmra.mrb[0].mxu0 %v637
    %v1006 = vpop.f32.mrb[0].mxu0
    %v1007 = vadd.f32 %v645, %v1006
    %v1008 = vpop.f32.mrb[0].mxu0
    %v1009 = vadd.f32 %v649, %v1008
    %v1010 = vpop.f32.mrb[0].mxu0
    %v1011 = vpop.f32.mrb[0].mxu0
    %1012 = vdwg.mxu0
    %1013 = vmatprep.subr.bf16.mxu0 %v877
    %1014 = vmatpush1.bf16.msra.mxu0 %v876
    %1015 = vmatprep.subr.bf16.mxu0 %v879
    %1016 = vmatpush1.bf16.msra.mxu0 %v878
    %1017 = vmatprep.subr.bf16.mxu0 %v881
    %1018 = vmatpush1.bf16.msra.mxu0 %v880
    %1019 = vmatprep.subr.bf16.mxu0 %v883
    %1020 = vmatpush1.bf16.msra.mxu0 %v882
    %1021 = vmatprep.subr.bf16.mxu0 %v885
    %1022 = vmatpush1.bf16.msra.mxu0 %v884
    %1023 = vmatprep.subr.bf16.mxu0 %v887
    %1024 = vmatpush1.bf16.msra.mxu0 %v886
    %1025 = vmatprep.subr.bf16.mxu0 %v889
    %1026 = vmatpush1.bf16.msra.mxu0 %v888
    %1027 = vmatprep.subr.bf16.mxu0 %v891
    %1028 = vmatpush1.bf16.msra.mxu0 %v890
    %1029 = vmatprep.subr.bf16.mxu0 %v893
    %1030 = vmatpush1.bf16.msra.mxu0 %v892
    %1031 = vmatprep.subr.bf16.mxu0 %v895
    %1032 = vmatpush1.bf16.msra.mxu0 %v894
    %1033 = vmatprep.subr.bf16.mxu0 %v897
    %1034 = vmatpush1.bf16.msra.mxu0 %v896
    %1035 = vmatprep.subr.bf16.mxu0 %v899
    %1036 = vmatpush1.bf16.msra.mxu0 %v898
    %1037 = vmatprep.subr.bf16.mxu0 %v901
    %1038 = vmatpush1.bf16.msra.mxu0 %v900
    %1039 = vmatprep.subr.bf16.mxu0 %v903
    %1040 = vmatpush1.bf16.msra.mxu0 %v902
    %1041 = vmatprep.subr.bf16.mxu0 %v905
    %1042 = vmatpush1.bf16.msra.mxu0 %v904
    %1043 = vmatprep.subr.bf16.mxu0 %v907
    %1044 = vmatpush1.bf16.msra.mxu0 %v906
    %1045 = vmatprep.mubr.bf16.mxu0 %v640
    %1046 = vmatmul.mubr.bf16.gmra.mrb[0].mxu0 %v639
    %v1047 = vpop.f32.mrb[0].mxu0
    %v1048 = vadd.f32 %v1007, %v1047
    %v1049 = vpop.f32.mrb[0].mxu0
    %v1050 = vadd.f32 %v1009, %v1049
    %v1051 = vpop.f32.mrb[0].mxu0
    %v1052 = vpop.f32.mrb[0].mxu0
    %1053 = vdwg.mxu0
    %v1054 = vmax.f32 %v1048, 0.0
    %v1055 = vmax.f32 %v1050, 0.0
    %v1056 = vld [vmem:[#allocation7 + $0x200] sm:$0xf]
    %v1057 = vld [vmem:[#allocation7 + $0x208] sm:$0xf]
    %v1058 = vld [vmem:[#allocation7 + $0x210] sm:$0xf]
    %v1059 = vld [vmem:[#allocation7 + $0x218] sm:$0xf]
    %v1060 = vld [vmem:[#allocation7 + $0x220] sm:$0xf]
    %v1061 = vld [vmem:[#allocation7 + $0x228] sm:$0xf]
    %v1062 = vld [vmem:[#allocation7 + $0x230] sm:$0xf]
    %v1063 = vld [vmem:[#allocation7 + $0x238] sm:$0xf]
    %v1064 = vld [vmem:[#allocation7 + $0x240] sm:$0xf]
    %v1065 = vld [vmem:[#allocation7 + $0x248] sm:$0xf]
    %v1066 = vld [vmem:[#allocation7 + $0x250] sm:$0xf]
    %v1067 = vld [vmem:[#allocation7 + $0x258] sm:$0xf]
    %v1068 = vld [vmem:[#allocation7 + $0x260] sm:$0xf]
    %v1069 = vld [vmem:[#allocation7 + $0x268] sm:$0xf]
    %v1070 = vld [vmem:[#allocation7 + $0x270] sm:$0xf]
    %v1071 = vld [vmem:[#allocation7 + $0x278] sm:$0xf]
    %v1072 = vld [vmem:[#allocation7 + $0x280] sm:$0xf]
    %v1073 = vld [vmem:[#allocation7 + $0x288] sm:$0xf]
    %v1074 = vld [vmem:[#allocation7 + $0x290] sm:$0xf]
    %v1075 = vld [vmem:[#allocation7 + $0x298] sm:$0xf]
    %v1076 = vld [vmem:[#allocation7 + $0x2a0] sm:$0xf]
    %v1077 = vld [vmem:[#allocation7 + $0x2a8] sm:$0xf]
    %v1078 = vld [vmem:[#allocation7 + $0x2b0] sm:$0xf]
    %v1079 = vld [vmem:[#allocation7 + $0x2b8] sm:$0xf]
    %v1080 = vld [vmem:[#allocation7 + $0x2c0] sm:$0xf]
    %v1081 = vld [vmem:[#allocation7 + $0x2c8] sm:$0xf]
    %v1082 = vld [vmem:[#allocation7 + $0x2d0] sm:$0xf]
    %v1083 = vld [vmem:[#allocation7 + $0x2d8] sm:$0xf]
    %v1084 = vld [vmem:[#allocation7 + $0x2e0] sm:$0xf]
    %v1085 = vld [vmem:[#allocation7 + $0x2e8] sm:$0xf]
    %v1086 = vld [vmem:[#allocation7 + $0x2f0] sm:$0xf]
    %v1087 = vld [vmem:[#allocation7 + $0x2f8] sm:$0xf]
    %v1088 = vld [vmem:[#allocation8 + $0x2] ss:$0 sm:$0xff]
    %v1089 = vpack.c.bf16 %v1054, %v1054
    %v1090 = vpack.c.bf16 %v1055, %v1055
    %v1123 = vunpack.c.l.b16 %v1056
    %v1124 = vunpack.c.l.b16 %v1057
    %v1125 = vunpack.c.l.b16 %v1058
    %v1126 = vunpack.c.l.b16 %v1059
    %v1127 = vunpack.c.l.b16 %v1060
    %v1128 = vunpack.c.l.b16 %v1061
    %v1129 = vunpack.c.l.b16 %v1062
    %v1130 = vunpack.c.l.b16 %v1063
    %v1131 = vunpack.c.l.b16 %v1064
    %v1132 = vunpack.c.l.b16 %v1065
    %v1133 = vunpack.c.l.b16 %v1066
    %v1134 = vunpack.c.l.b16 %v1067
    %v1135 = vunpack.c.l.b16 %v1068
    %v1136 = vunpack.c.l.b16 %v1069
    %v1137 = vunpack.c.l.b16 %v1070
    %v1138 = vunpack.c.l.b16 %v1071
    %v1139 = vunpack.c.l.b16 %v1072
    %v1140 = vunpack.c.l.b16 %v1073
    %v1141 = vunpack.c.l.b16 %v1074
    %v1142 = vunpack.c.l.b16 %v1075
    %v1143 = vunpack.c.l.b16 %v1076
    %v1144 = vunpack.c.l.b16 %v1077
    %v1145 = vunpack.c.l.b16 %v1078
    %v1146 = vunpack.c.l.b16 %v1079
    %v1147 = vunpack.c.l.b16 %v1080
    %v1148 = vunpack.c.l.b16 %v1081
    %v1149 = vunpack.c.l.b16 %v1082
    %v1150 = vunpack.c.l.b16 %v1083
    %v1151 = vunpack.c.l.b16 %v1084
    %v1152 = vunpack.c.l.b16 %v1085
    %v1153 = vunpack.c.l.b16 %v1086
    %v1154 = vunpack.c.l.b16 %v1087
    %v1155 = vpack.c.b16 %v1124, %v1123
    %v1156 = vpack.c.b16 %v1126, %v1125
    %v1157 = vpack.c.b16 %v1128, %v1127
    %v1158 = vpack.c.b16 %v1130, %v1129
    %v1159 = vpack.c.b16 %v1132, %v1131
    %v1160 = vpack.c.b16 %v1134, %v1133
    %v1161 = vpack.c.b16 %v1136, %v1135
    %v1162 = vpack.c.b16 %v1138, %v1137
    %v1163 = vpack.c.b16 %v1140, %v1139
    %v1164 = vpack.c.b16 %v1142, %v1141
    %v1165 = vpack.c.b16 %v1144, %v1143
    %v1166 = vpack.c.b16 %v1146, %v1145
    %v1167 = vpack.c.b16 %v1148, %v1147
    %v1168 = vpack.c.b16 %v1150, %v1149
    %v1169 = vpack.c.b16 %v1152, %v1151
    %v1170 = vpack.c.b16 %v1154, %v1153
    %1187 = vmatprep.subr.bf16.mxu0 0
    %1188 = vmatpush1.bf16.msra.mxu0 %v1155
    %1189 = vmatprep.subr.bf16.mxu0 0
    %1190 = vmatpush1.bf16.msra.mxu0 %v1156
    %1191 = vmatprep.subr.bf16.mxu0 0
    %1192 = vmatpush1.bf16.msra.mxu0 %v1157
    %1193 = vmatprep.subr.bf16.mxu0 0
    %1194 = vmatpush1.bf16.msra.mxu0 %v1158
    %1195 = vmatprep.subr.bf16.mxu0 0
    %1196 = vmatpush1.bf16.msra.mxu0 %v1159
    %1197 = vmatprep.subr.bf16.mxu0 0
    %1198 = vmatpush1.bf16.msra.mxu0 %v1160
    %1199 = vmatprep.subr.bf16.mxu0 0
    %1200 = vmatpush1.bf16.msra.mxu0 %v1161
    %1201 = vmatprep.subr.bf16.mxu0 0
    %1202 = vmatpush1.bf16.msra.mxu0 %v1162
    %1203 = vmatprep.subr.bf16.mxu0 0
    %1204 = vmatpush1.bf16.msra.mxu0 %v1163
    %1205 = vmatprep.subr.bf16.mxu0 0
    %1206 = vmatpush1.bf16.msra.mxu0 %v1164
    %1207 = vmatprep.subr.bf16.mxu0 0
    %1208 = vmatpush1.bf16.msra.mxu0 %v1165
    %1209 = vmatprep.subr.bf16.mxu0 0
    %1210 = vmatpush1.bf16.msra.mxu0 %v1166
    %1211 = vmatprep.subr.bf16.mxu0 0
    %1212 = vmatpush1.bf16.msra.mxu0 %v1167
    %1213 = vmatprep.subr.bf16.mxu0 0
    %1214 = vmatpush1.bf16.msra.mxu0 %v1168
    %1215 = vmatprep.subr.bf16.mxu0 0
    %1216 = vmatpush1.bf16.msra.mxu0 %v1169
    %1217 = vmatprep.subr.bf16.mxu0 0
    %1218 = vmatpush1.bf16.msra.mxu0 %v1170
    %1219 = vmatprep.mubr.bf16.mxu0 %v1090
    %1220 = vmatmul.mubr.bf16.gmra.mrb[0].mxu0 %v1089
    %v1221 = vpop.f32.mrb[0].mxu0
    %v1222 = vadd.f32 %v1088, %v1221
    %v1223 = vpop.f32.mrb[0].mxu0
    %v1224 = vpop.f32.mrb[0].mxu0
    %v1225 = vpop.f32.mrb[0].mxu0
    %1226 = vdwg.mxu0
    %v1227 = vmax.f32 %v1222, 0.0
    %v1228 = vld [vmem:[#allocation7 + $0x300] sm:$0xf]
    %v1229 = vld [vmem:[#allocation7 + $0x308] sm:$0xf]
    %v1230 = vld [vmem:[#allocation7 + $0x310] sm:$0xf]
    %v1231 = vld [vmem:[#allocation7 + $0x318] sm:$0xf]
    %v1232 = vld [vmem:[#allocation7 + $0x320] sm:$0xf]
    %v1233 = vld [vmem:[#allocation7 + $0x328] sm:$0xf]
    %v1234 = vld [vmem:[#allocation7 + $0x330] sm:$0xf]
    %v1235 = vld [vmem:[#allocation7 + $0x338] sm:$0xf]
    %v1236 = vld [vmem:[#allocation7 + $0x340] sm:$0xf]
    %v1237 = vld [vmem:[#allocation7 + $0x348] sm:$0xf]
    %v1238 = vld [vmem:[#allocation7 + $0x350] sm:$0xf]
    %v1239 = vld [vmem:[#allocation7 + $0x358] sm:$0xf]
    %v1240 = vld [vmem:[#allocation7 + $0x360] sm:$0xf]
    %v1241 = vld [vmem:[#allocation7 + $0x368] sm:$0xf]
    %v1242 = vld [vmem:[#allocation7 + $0x370] sm:$0xf]
    %v1243 = vld [vmem:[#allocation7 + $0x378] sm:$0xf]
    %v1244 = vld [vmem:[#allocation8 + $0x3] ss:$0 sm:$0xff]
    %v1245 = vpack.c.bf16 %v1227, %v1227
    %v1262 = vunpack.c.l.b16 %v1228
    %v1263 = vunpack.c.l.b16 %v1229
    %v1264 = vunpack.c.l.b16 %v1230
    %v1265 = vunpack.c.l.b16 %v1231
    %v1266 = vunpack.c.l.b16 %v1232
    %v1267 = vunpack.c.l.b16 %v1233
    %v1268 = vunpack.c.l.b16 %v1234
    %v1269 = vunpack.c.l.b16 %v1235
    %v1270 = vunpack.c.l.b16 %v1236
    %v1271 = vunpack.c.l.b16 %v1237
    %v1272 = vunpack.c.l.b16 %v1238
    %v1273 = vunpack.c.l.b16 %v1239
    %v1274 = vunpack.c.l.b16 %v1240
    %v1275 = vunpack.c.l.b16 %v1241
    %v1276 = vunpack.c.l.b16 %v1242
    %v1277 = vunpack.c.l.b16 %v1243
    %v1278 = vpack.c.b16 %v1263, %v1262
    %v1279 = vpack.c.b16 %v1265, %v1264
    %v1280 = vpack.c.b16 %v1267, %v1266
    %v1281 = vpack.c.b16 %v1269, %v1268
    %v1282 = vpack.c.b16 %v1271, %v1270
    %v1283 = vpack.c.b16 %v1273, %v1272
    %v1284 = vpack.c.b16 %v1275, %v1274
    %v1285 = vpack.c.b16 %v1277, %v1276
    %1294 = vmatprep.subr.bf16.mxu0 0
    %1295 = vmatpush1.bf16.msra.mxu0 %v1278
    %1296 = vmatprep.subr.bf16.mxu0 0
    %1297 = vmatpush1.bf16.msra.mxu0 %v1279
    %1298 = vmatprep.subr.bf16.mxu0 0
    %1299 = vmatpush1.bf16.msra.mxu0 %v1280
    %1300 = vmatprep.subr.bf16.mxu0 0
    %1301 = vmatpush1.bf16.msra.mxu0 %v1281
    %1302 = vmatprep.subr.bf16.mxu0 0
    %1303 = vmatpush1.bf16.msra.mxu0 %v1282
    %1304 = vmatprep.subr.bf16.mxu0 0
    %1305 = vmatpush1.bf16.msra.mxu0 %v1283
    %1306 = vmatprep.subr.bf16.mxu0 0
    %1307 = vmatpush1.bf16.msra.mxu0 %v1284
    %1308 = vmatprep.subr.bf16.mxu0 0
    %1309 = vmatpush1.bf16.msra.mxu0 %v1285
    %1310 = vmatprep.subr.bf16.mxu0 0
    %1311 = vmatpush1.bf16.msra.mxu0 0
    %1312 = vmatprep.subr.bf16.mxu0 0
    %1313 = vmatpush1.bf16.msra.mxu0 0
    %1314 = vmatprep.subr.bf16.mxu0 0
    %1315 = vmatpush1.bf16.msra.mxu0 0
    %1316 = vmatprep.subr.bf16.mxu0 0
    %1317 = vmatpush1.bf16.msra.mxu0 0
    %1318 = vmatprep.subr.bf16.mxu0 0
    %1319 = vmatpush1.bf16.msra.mxu0 0
    %1320 = vmatprep.subr.bf16.mxu0 0
    %1321 = vmatpush1.bf16.msra.mxu0 0
    %1322 = vmatprep.subr.bf16.mxu0 0
    %1323 = vmatpush1.bf16.msra.mxu0 0
    %1324 = vmatprep.subr.bf16.mxu0 0
    %1325 = vmatpush1.bf16.msra.mxu0 0
    %1326 = vmatprep.mubr.bf16.mxu0 0
    %1327 = vmatmul.mubr.bf16.gmra.mrb[0].mxu0 %v1245
    %v1328 = vpop.f32.mrb[0].mxu0
    %v1329 = vadd.f32 %v1244, %v1328
    %v1330 = vpop.f32.mrb[0].mxu0
    %v1331 = vpop.f32.mrb[0].mxu0
    %v1332 = vpop.f32.mrb[0].mxu0
    %1333 = vdwg.mxu0
    %v1334 = vmax.f32 %v1329, 0.0
    %v1335 = vld [vmem:[#allocation7 + $0x380] sm:$0xf]
    %v1336 = vld [vmem:[#allocation7 + $0x388] sm:$0xf]
    %v1337 = vld [vmem:[#allocation7 + $0x390] sm:$0xf]
    %v1338 = vld [vmem:[#allocation7 + $0x398] sm:$0xf]
    %v1339 = vld [vmem:[#allocation7 + $0x3a0] sm:$0xf]
    %v1340 = vld [vmem:[#allocation7 + $0x3a8] sm:$0xf]
    %v1341 = vld [vmem:[#allocation7 + $0x3b0] sm:$0xf]
    %v1342 = vld [vmem:[#allocation7 + $0x3b8] sm:$0xf]
    %v1343 = vld [vmem:[#allocation8 + $0x4] ss:$0 sm:$0xff]
    %v1344 = vpack.c.bf16 %v1334, %v1334
    %v1353 = vunpack.c.l.b16 %v1335
    %v1354 = vunpack.c.l.b16 %v1336
    %v1355 = vunpack.c.l.b16 %v1337
    %v1356 = vunpack.c.l.b16 %v1338
    %v1357 = vunpack.c.l.b16 %v1339
    %v1358 = vunpack.c.l.b16 %v1340
    %v1359 = vunpack.c.l.b16 %v1341
    %v1360 = vunpack.c.l.b16 %v1342
    %v1361 = vpack.c.b16 %v1354, %v1353
    %v1362 = vpack.c.b16 %v1356, %v1355
    %v1363 = vpack.c.b16 %v1358, %v1357
    %v1364 = vpack.c.b16 %v1360, %v1359
    %vm1369 = vcmask 523264
    %v1371 = vsel %vm1369, %v1344, 0
    %1373 = vmatprep.subr.bf16.mxu0 0
    %1374 = vmatpush1.bf16.msra.mxu0 %v1361
    %1375 = vmatprep.subr.bf16.mxu0 0
    %1376 = vmatpush1.bf16.msra.mxu0 %v1362
    %1377 = vmatprep.subr.bf16.mxu0 0
    %1378 = vmatpush1.bf16.msra.mxu0 %v1363
    %1379 = vmatprep.subr.bf16.mxu0 0
    %1380 = vmatpush1.bf16.msra.mxu0 %v1364
    %1381 = vmatprep.subr.bf16.mxu0 0
    %1382 = vmatpush1.bf16.msra.mxu0 0
    %1383 = vmatprep.subr.bf16.mxu0 0
    %1384 = vmatpush1.bf16.msra.mxu0 0
    %1385 = vmatprep.subr.bf16.mxu0 0
    %1386 = vmatpush1.bf16.msra.mxu0 0
    %1387 = vmatprep.subr.bf16.mxu0 0
    %1388 = vmatpush1.bf16.msra.mxu0 0
    %1389 = vmatprep.subr.bf16.mxu0 0
    %1390 = vmatpush1.bf16.msra.mxu0 0
    %1391 = vmatprep.subr.bf16.mxu0 0
    %1392 = vmatpush1.bf16.msra.mxu0 0
    %1393 = vmatprep.subr.bf16.mxu0 0
    %1394 = vmatpush1.bf16.msra.mxu0 0
    %1395 = vmatprep.subr.bf16.mxu0 0
    %1396 = vmatpush1.bf16.msra.mxu0 0
    %1397 = vmatprep.subr.bf16.mxu0 0
    %1398 = vmatpush1.bf16.msra.mxu0 0
    %1399 = vmatprep.subr.bf16.mxu0 0
    %1400 = vmatpush1.bf16.msra.mxu0 0
    %1401 = vmatprep.subr.bf16.mxu0 0
    %1402 = vmatpush1.bf16.msra.mxu0 0
    %1403 = vmatprep.subr.bf16.mxu0 0
    %1404 = vmatpush1.bf16.msra.mxu0 0
    %1405 = vmatprep.mubr.bf16.mxu0 0
    %1406 = vmatmul.mubr.bf16.gmra.mrb[0].mxu0 %v1371
    %v1407 = vpop.f32.mrb[0].mxu0
    %v1408 = vadd.f32 %v1343, %v1407
    %v1409 = vpop.f32.mrb[0].mxu0
    %v1410 = vpop.f32.mrb[0].mxu0
    %v1411 = vpop.f32.mrb[0].mxu0
    %1412 = vdwg.mxu0
    %vm1413 = vcmask 64512
    %1414 = vst.msk [vmem:[#allocation10] sm:$0xff] %vm1413, %v1408
    %v1415 = vld [vmem:[#allocation7 + $0x3c0] sm:$0xf]
    %v1416 = vld [vmem:[#allocation8 + $0x5] ss:$0 sm:$0xff]
    %v1417 = vpack.c.bf16 %v1408, %v1408
    %v1419 = vsel %vm1413, %v1417, 0
    %vm1421 = vcmask 1043456
    %v1423 = vsel %vm1421, %v1415, 0
    %1425 = vmatprep.subr.bf16.mxu0 0
    %1426 = vmatpush1.bf16.msra.mxu0 %v1423
    %1427 = vmatprep.subr.bf16.mxu0 0
    %1428 = vmatpush1.bf16.msra.mxu0 0
    %1429 = vmatprep.subr.bf16.mxu0 0
    %1430 = vmatpush1.bf16.msra.mxu0 0
    %1431 = vmatprep.subr.bf16.mxu0 0
    %1432 = vmatpush1.bf16.msra.mxu0 0
    %1433 = vmatprep.subr.bf16.mxu0 0
    %1434 = vmatpush1.bf16.msra.mxu0 0
    %1435 = vmatprep.subr.bf16.mxu0 0
    %1436 = vmatpush1.bf16.msra.mxu0 0
    %1437 = vmatprep.subr.bf16.mxu0 0
    %1438 = vmatpush1.bf16.msra.mxu0 0
    %1439 = vmatprep.subr.bf16.mxu0 0
    %1440 = vmatpush1.bf16.msra.mxu0 0
    %1441 = vmatprep.subr.bf16.mxu0 0
    %1442 = vmatpush1.bf16.msra.mxu0 0
    %1443 = vmatprep.subr.bf16.mxu0 0
    %1444 = vmatpush1.bf16.msra.mxu0 0
    %1445 = vmatprep.subr.bf16.mxu0 0
    %1446 = vmatpush1.bf16.msra.mxu0 0
    %1447 = vmatprep.subr.bf16.mxu0 0
    %1448 = vmatpush1.bf16.msra.mxu0 0
    %1449 = vmatprep.subr.bf16.mxu0 0
    %1450 = vmatpush1.bf16.msra.mxu0 0
    %1451 = vmatprep.subr.bf16.mxu0 0
    %1452 = vmatpush1.bf16.msra.mxu0 0
    %1453 = vmatprep.subr.bf16.mxu0 0
    %1454 = vmatpush1.bf16.msra.mxu0 0
    %1455 = vmatprep.subr.bf16.mxu0 0
    %1456 = vmatpush1.bf16.msra.mxu0 0
    %1457 = vmatprep.mubr.bf16.mxu0 0
    %1458 = vmatmul.mubr.bf16.gmra.mrb[0].mxu0 %v1419
    %v1459 = vpop.f32.mrb[0].mxu0
    %v1460 = vadd.f32 %v1416, %v1459
    %v1461 = vpop.f32.mrb[0].mxu0
    %v1462 = vpop.f32.mrb[0].mxu0
    %v1463 = vpop.f32.mrb[0].mxu0
    %1464 = vdwg.mxu0
    %v1465 = vmax.f32 %v1460, 0.0
    %v1466 = vld [vmem:[#allocation7 + $0x3d0] sm:$0xf]
    %v1467 = vld [vmem:[#allocation7 + $0x3d8] sm:$0xf]
    %v1468 = vld [vmem:[#allocation7 + $0x3e0] sm:$0xf]
    %v1469 = vld [vmem:[#allocation7 + $0x3e8] sm:$0xf]
    %v1470 = vld [vmem:[#allocation7 + $0x3f0] sm:$0xf]
    %v1471 = vld [vmem:[#allocation7 + $0x3f8] sm:$0xf]
    %v1472 = vld [vmem:[#allocation7 + $0x400] sm:$0xf]
    %v1473 = vld [vmem:[#allocation7 + $0x408] sm:$0xf]
    %v1474 = vld [vmem:[#allocation8 + $0x6] ss:$0 sm:$0xff]
    %v1475 = vpack.c.bf16 %v1465, %v1465
    %v1484 = vunpack.c.l.b16 %v1466
    %v1485 = vunpack.c.l.b16 %v1467
    %v1486 = vunpack.c.l.b16 %v1468
    %v1487 = vunpack.c.l.b16 %v1469
    %v1488 = vunpack.c.l.b16 %v1470
    %v1489 = vunpack.c.l.b16 %v1471
    %v1490 = vunpack.c.l.b16 %v1472
    %v1491 = vunpack.c.l.b16 %v1473
    %v1492 = vpack.c.b16 %v1485, %v1484
    %v1493 = vpack.c.b16 %v1487, %v1486
    %v1494 = vpack.c.b16 %v1489, %v1488
    %v1495 = vpack.c.b16 %v1491, %v1490
    %v1501 = vsel %vm1369, %v1475, 0
    %1503 = vmatprep.subr.bf16.mxu0 0
    %1504 = vmatpush1.bf16.msra.mxu0 %v1492
    %1505 = vmatprep.subr.bf16.mxu0 0
    %1506 = vmatpush1.bf16.msra.mxu0 %v1493
    %1507 = vmatprep.subr.bf16.mxu0 0
    %1508 = vmatpush1.bf16.msra.mxu0 %v1494
    %1509 = vmatprep.subr.bf16.mxu0 0
    %1510 = vmatpush1.bf16.msra.mxu0 %v1495
    %1511 = vmatprep.subr.bf16.mxu0 0
    %1512 = vmatpush1.bf16.msra.mxu0 0
    %1513 = vmatprep.subr.bf16.mxu0 0
    %1514 = vmatpush1.bf16.msra.mxu0 0
    %1515 = vmatprep.subr.bf16.mxu0 0
    %1516 = vmatpush1.bf16.msra.mxu0 0
    %1517 = vmatprep.subr.bf16.mxu0 0
    %1518 = vmatpush1.bf16.msra.mxu0 0
    %1519 = vmatprep.subr.bf16.mxu0 0
    %1520 = vmatpush1.bf16.msra.mxu0 0
    %1521 = vmatprep.subr.bf16.mxu0 0
    %1522 = vmatpush1.bf16.msra.mxu0 0
    %1523 = vmatprep.subr.bf16.mxu0 0
    %1524 = vmatpush1.bf16.msra.mxu0 0
    %1525 = vmatprep.subr.bf16.mxu0 0
    %1526 = vmatpush1.bf16.msra.mxu0 0
    %1527 = vmatprep.subr.bf16.mxu0 0
    %1528 = vmatpush1.bf16.msra.mxu0 0
    %1529 = vmatprep.subr.bf16.mxu0 0
    %1530 = vmatpush1.bf16.msra.mxu0 0
    %1531 = vmatprep.subr.bf16.mxu0 0
    %1532 = vmatpush1.bf16.msra.mxu0 0
    %1533 = vmatprep.subr.bf16.mxu0 0
    %1534 = vmatpush1.bf16.msra.mxu0 0
    %1535 = vmatprep.mubr.bf16.mxu0 0
    %1536 = vmatmul.mubr.bf16.gmra.mrb[0].mxu0 %v1501
    %v1537 = vpop.f32.mrb[0].mxu0
    %v1538 = vadd.f32 %v1474, %v1537
    %v1539 = vpop.f32.mrb[0].mxu0
    %v1540 = vpop.f32.mrb[0].mxu0
    %v1541 = vpop.f32.mrb[0].mxu0
    %1542 = vdwg.mxu0
    %v1543 = vmax.f32 %v1538, 0.0
    %v1544 = vld [vmem:[#allocation7 + $0x410] sm:$0xff]
    %v1545 = vld [vmem:[#allocation7 + $0x418] sm:$0xff]
    %v1546 = vld [vmem:[#allocation7 + $0x420] sm:$0xff]
    %v1547 = vld [vmem:[#allocation7 + $0x428] sm:$0xff]
    %v1548 = vld [vmem:[#allocation7 + $0x430] sm:$0xff]
    %v1549 = vld [vmem:[#allocation7 + $0x438] sm:$0xff]
    %v1550 = vld [vmem:[#allocation7 + $0x440] sm:$0xff]
    %v1551 = vld [vmem:[#allocation7 + $0x448] sm:$0xff]
    %v1552 = vld [vmem:[#allocation7 + $0x450] sm:$0xff]
    %v1553 = vld [vmem:[#allocation7 + $0x458] sm:$0xff]
    %v1554 = vld [vmem:[#allocation7 + $0x460] sm:$0xff]
    %v1555 = vld [vmem:[#allocation7 + $0x468] sm:$0xff]
    %v1556 = vld [vmem:[#allocation7 + $0x470] sm:$0xff]
    %v1557 = vld [vmem:[#allocation7 + $0x478] sm:$0xff]
    %v1558 = vld [vmem:[#allocation7 + $0x480] sm:$0xff]
    %v1559 = vld [vmem:[#allocation7 + $0x488] sm:$0xff]
    %s1560 = scalar_lea.vmem [#allocation8], 7
    %v1561 = vld [vmem:[%s1560] ss:$8 sm:$0x3]
    %v1562 = vpack.c.bf16 %v1543, %v1543
    %v1564 = vlaneseq
    %v1565 = vshrl.u32 %v1564, 7
    %v1566 = vsub.s32 0, %v1565
    %v1567 = vrot.slane %v1561, %v1566
    %v1568 = vlaneseq
    %v1569 = vshrl.u32 %v1568, 7
    %v1570 = vsub.s32 1, %v1569
    %v1571 = vrot.slane %v1561, %v1570
    %v1590 = vunpack.c.l.b16 %v1544
    %v1591 = vunpack.c.h.b16 %v1544
    %v1592 = vunpack.c.l.b16 %v1545
    %v1593 = vunpack.c.h.b16 %v1545
    %v1594 = vunpack.c.l.b16 %v1546
    %v1595 = vunpack.c.h.b16 %v1546
    %v1596 = vunpack.c.l.b16 %v1547
    %v1597 = vunpack.c.h.b16 %v1547
    %v1598 = vunpack.c.l.b16 %v1548
    %v1599 = vunpack.c.h.b16 %v1548
    %v1600 = vunpack.c.l.b16 %v1549
    %v1601 = vunpack.c.h.b16 %v1549
    %v1602 = vunpack.c.l.b16 %v1550
    %v1603 = vunpack.c.h.b16 %v1550
    %v1604 = vunpack.c.l.b16 %v1551
    %v1605 = vunpack.c.h.b16 %v1551
    %v1606 = vunpack.c.l.b16 %v1552
    %v1607 = vunpack.c.h.b16 %v1552
    %v1608 = vunpack.c.l.b16 %v1553
    %v1609 = vunpack.c.h.b16 %v1553
    %v1610 = vunpack.c.l.b16 %v1554
    %v1611 = vunpack.c.h.b16 %v1554
    %v1612 = vunpack.c.l.b16 %v1555
    %v1613 = vunpack.c.h.b16 %v1555
    %v1614 = vunpack.c.l.b16 %v1556
    %v1615 = vunpack.c.h.b16 %v1556
    %v1616 = vunpack.c.l.b16 %v1557
    %v1617 = vunpack.c.h.b16 %v1557
    %v1618 = vunpack.c.l.b16 %v1558
    %v1619 = vunpack.c.h.b16 %v1558
    %v1620 = vunpack.c.l.b16 %v1559
    %v1621 = vunpack.c.h.b16 %v1559
    %v1622 = vpack.c.b16 %v1592, %v1590
    %v1623 = vpack.c.b16 %v1593, %v1591
    %v1624 = vpack.c.b16 %v1596, %v1594
    %v1625 = vpack.c.b16 %v1597, %v1595
    %v1626 = vpack.c.b16 %v1600, %v1598
    %v1627 = vpack.c.b16 %v1601, %v1599
    %v1628 = vpack.c.b16 %v1604, %v1602
    %v1629 = vpack.c.b16 %v1605, %v1603
    %v1630 = vpack.c.b16 %v1608, %v1606
    %v1631 = vpack.c.b16 %v1609, %v1607
    %v1632 = vpack.c.b16 %v1612, %v1610
    %v1633 = vpack.c.b16 %v1613, %v1611
    %v1634 = vpack.c.b16 %v1616, %v1614
    %v1635 = vpack.c.b16 %v1617, %v1615
    %v1636 = vpack.c.b16 %v1620, %v1618
    %v1637 = vpack.c.b16 %v1621, %v1619
    %1654 = vmatprep.subr.bf16.mxu0 %v1623
    %1655 = vmatpush1.bf16.msra.mxu0 %v1622
    %1656 = vmatprep.subr.bf16.mxu0 %v1625
    %1657 = vmatpush1.bf16.msra.mxu0 %v1624
    %1658 = vmatprep.subr.bf16.mxu0 %v1627
    %1659 = vmatpush1.bf16.msra.mxu0 %v1626
    %1660 = vmatprep.subr.bf16.mxu0 %v1629
    %1661 = vmatpush1.bf16.msra.mxu0 %v1628
    %1662 = vmatprep.subr.bf16.mxu0 %v1631
    %1663 = vmatpush1.bf16.msra.mxu0 %v1630
    %1664 = vmatprep.subr.bf16.mxu0 %v1633
    %1665 = vmatpush1.bf16.msra.mxu0 %v1632
    %1666 = vmatprep.subr.bf16.mxu0 %v1635
    %1667 = vmatpush1.bf16.msra.mxu0 %v1634
    %1668 = vmatprep.subr.bf16.mxu0 %v1637
    %1669 = vmatpush1.bf16.msra.mxu0 %v1636
    %1670 = vmatprep.subr.bf16.mxu0 0
    %1671 = vmatpush1.bf16.msra.mxu0 0
    %1672 = vmatprep.subr.bf16.mxu0 0
    %1673 = vmatpush1.bf16.msra.mxu0 0
    %1674 = vmatprep.subr.bf16.mxu0 0
    %1675 = vmatpush1.bf16.msra.mxu0 0
    %1676 = vmatprep.subr.bf16.mxu0 0
    %1677 = vmatpush1.bf16.msra.mxu0 0
    %1678 = vmatprep.subr.bf16.mxu0 0
    %1679 = vmatpush1.bf16.msra.mxu0 0
    %1680 = vmatprep.subr.bf16.mxu0 0
    %1681 = vmatpush1.bf16.msra.mxu0 0
    %1682 = vmatprep.subr.bf16.mxu0 0
    %1683 = vmatpush1.bf16.msra.mxu0 0
    %1684 = vmatprep.subr.bf16.mxu0 0
    %1685 = vmatpush1.bf16.msra.mxu0 0
    %1686 = vmatprep.mubr.bf16.mxu0 0
    %1687 = vmatmul.mubr.bf16.gmra.mrb[0].mxu0 %v1562
    %v1688 = vpop.f32.mrb[0].mxu0
    %v1689 = vadd.f32 %v1567, %v1688
    %v1690 = vpop.f32.mrb[0].mxu0
    %v1691 = vadd.f32 %v1571, %v1690
    %v1692 = vpop.f32.mrb[0].mxu0
    %v1693 = vpop.f32.mrb[0].mxu0
    %1694 = vdwg.mxu0
    %v1695 = vmax.f32 %v1689, 0.0
    %v1696 = vmax.f32 %v1691, 0.0
    %v1697 = vld [vmem:[#allocation5 + $0x200] sm:$0xff]
    %v1698 = vld [vmem:[#allocation5 + $0x208] sm:$0xff]
    %v1699 = vld [vmem:[#allocation5 + $0x210] sm:$0xff]
    %v1700 = vld [vmem:[#allocation5 + $0x218] sm:$0xff]
    %v1701 = vld [vmem:[#allocation5 + $0x220] sm:$0xff]
    %v1702 = vld [vmem:[#allocation5 + $0x228] sm:$0xff]
    %v1703 = vld [vmem:[#allocation5 + $0x230] sm:$0xff]
    %v1704 = vld [vmem:[#allocation5 + $0x238] sm:$0xff]
    %v1705 = vld [vmem:[#allocation5 + $0x240] sm:$0xff]
    %v1706 = vld [vmem:[#allocation5 + $0x248] sm:$0xff]
    %v1707 = vld [vmem:[#allocation5 + $0x250] sm:$0xff]
    %v1708 = vld [vmem:[#allocation5 + $0x258] sm:$0xff]
    %v1709 = vld [vmem:[#allocation5 + $0x260] sm:$0xff]
    %v1710 = vld [vmem:[#allocation5 + $0x268] sm:$0xff]
    %v1711 = vld [vmem:[#allocation5 + $0x270] sm:$0xff]
    %v1712 = vld [vmem:[#allocation5 + $0x278] sm:$0xff]
    %v1713 = vld [vmem:[#allocation5 + $0x280] sm:$0xff]
    %v1714 = vld [vmem:[#allocation5 + $0x288] sm:$0xff]
    %v1715 = vld [vmem:[#allocation5 + $0x290] sm:$0xff]
    %v1716 = vld [vmem:[#allocation5 + $0x298] sm:$0xff]
    %v1717 = vld [vmem:[#allocation5 + $0x2a0] sm:$0xff]
    %v1718 = vld [vmem:[#allocation5 + $0x2a8] sm:$0xff]
    %v1719 = vld [vmem:[#allocation5 + $0x2b0] sm:$0xff]
    %v1720 = vld [vmem:[#allocation5 + $0x2b8] sm:$0xff]
    %v1721 = vld [vmem:[#allocation5 + $0x2c0] sm:$0xff]
    %v1722 = vld [vmem:[#allocation5 + $0x2c8] sm:$0xff]
    %v1723 = vld [vmem:[#allocation5 + $0x2d0] sm:$0xff]
    %v1724 = vld [vmem:[#allocation5 + $0x2d8] sm:$0xff]
    %v1725 = vld [vmem:[#allocation5 + $0x2e0] sm:$0xff]
    %v1726 = vld [vmem:[#allocation5 + $0x2e8] sm:$0xff]
    %v1727 = vld [vmem:[#allocation5 + $0x2f0] sm:$0xff]
    %v1728 = vld [vmem:[#allocation5 + $0x2f8] sm:$0xff]
    %v1729 = vld [vmem:[#allocation5 + $0x300] sm:$0xff]
    %v1730 = vld [vmem:[#allocation5 + $0x308] sm:$0xff]
    %v1731 = vld [vmem:[#allocation5 + $0x310] sm:$0xff]
    %v1732 = vld [vmem:[#allocation5 + $0x318] sm:$0xff]
    %v1733 = vld [vmem:[#allocation5 + $0x320] sm:$0xff]
    %v1734 = vld [vmem:[#allocation5 + $0x328] sm:$0xff]
    %v1735 = vld [vmem:[#allocation5 + $0x330] sm:$0xff]
    %v1736 = vld [vmem:[#allocation5 + $0x338] sm:$0xff]
    %v1737 = vld [vmem:[#allocation5 + $0x340] sm:$0xff]
    %v1738 = vld [vmem:[#allocation5 + $0x348] sm:$0xff]
    %v1739 = vld [vmem:[#allocation5 + $0x350] sm:$0xff]
    %v1740 = vld [vmem:[#allocation5 + $0x358] sm:$0xff]
    %v1741 = vld [vmem:[#allocation5 + $0x360] sm:$0xff]
    %v1742 = vld [vmem:[#allocation5 + $0x368] sm:$0xff]
    %v1743 = vld [vmem:[#allocation5 + $0x370] sm:$0xff]
    %v1744 = vld [vmem:[#allocation5 + $0x378] sm:$0xff]
    %v1745 = vld [vmem:[#allocation5 + $0x380] sm:$0xff]
    %v1746 = vld [vmem:[#allocation5 + $0x388] sm:$0xff]
    %v1747 = vld [vmem:[#allocation5 + $0x390] sm:$0xff]
    %v1748 = vld [vmem:[#allocation5 + $0x398] sm:$0xff]
    %v1749 = vld [vmem:[#allocation5 + $0x3a0] sm:$0xff]
    %v1750 = vld [vmem:[#allocation5 + $0x3a8] sm:$0xff]
    %v1751 = vld [vmem:[#allocation5 + $0x3b0] sm:$0xff]
    %v1752 = vld [vmem:[#allocation5 + $0x3b8] sm:$0xff]
    %v1753 = vld [vmem:[#allocation5 + $0x3c0] sm:$0xff]
    %v1754 = vld [vmem:[#allocation5 + $0x3c8] sm:$0xff]
    %v1755 = vld [vmem:[#allocation5 + $0x3d0] sm:$0xff]
    %v1756 = vld [vmem:[#allocation5 + $0x3d8] sm:$0xff]
    %v1757 = vld [vmem:[#allocation5 + $0x3e0] sm:$0xff]
    %v1758 = vld [vmem:[#allocation5 + $0x3e8] sm:$0xff]
    %v1759 = vld [vmem:[#allocation5 + $0x3f0] sm:$0xff]
    %v1760 = vld [vmem:[#allocation5 + $0x3f8] sm:$0xff]
    %s1761 = scalar_lea.vmem [#allocation8], 32
    %v1762 = vld [vmem:[%s1761] ss:$8 sm:$0xf]
    %v1763 = vpack.c.bf16 %v1695, %v1695
    %v1764 = vpack.c.bf16 %v1696, %v1696
    %v1766 = vlaneseq
    %v1767 = vshrl.u32 %v1766, 7
    %v1768 = vsub.s32 0, %v1767
    %v1769 = vrot.slane %v1762, %v1768
    %v1770 = vlaneseq
    %v1771 = vshrl.u32 %v1770, 7
    %v1772 = vsub.s32 1, %v1771
    %v1773 = vrot.slane %v1762, %v1772
    %v1774 = vlaneseq
    %v1775 = vshrl.u32 %v1774, 7
    %v1776 = vsub.s32 2, %v1775
    %v1777 = vrot.slane %v1762, %v1776
    %v1778 = vlaneseq
    %v1779 = vshrl.u32 %v1778, 7
    %v1780 = vsub.s32 3, %v1779
    %v1781 = vrot.slane %v1762, %v1780
    %v1850 = vunpack.c.l.b16 %v1697
    %v1851 = vunpack.c.h.b16 %v1697
    %v1852 = vunpack.c.l.b16 %v1698
    %v1853 = vunpack.c.h.b16 %v1698
    %v1854 = vunpack.c.l.b16 %v1699
    %v1855 = vunpack.c.h.b16 %v1699
    %v1856 = vunpack.c.l.b16 %v1700
    %v1857 = vunpack.c.h.b16 %v1700
    %v1858 = vunpack.c.l.b16 %v1701
    %v1859 = vunpack.c.h.b16 %v1701
    %v1860 = vunpack.c.l.b16 %v1702
    %v1861 = vunpack.c.h.b16 %v1702
    %v1862 = vunpack.c.l.b16 %v1703
    %v1863 = vunpack.c.h.b16 %v1703
    %v1864 = vunpack.c.l.b16 %v1704
    %v1865 = vunpack.c.h.b16 %v1704
    %v1866 = vunpack.c.l.b16 %v1705
    %v1867 = vunpack.c.h.b16 %v1705
    %v1868 = vunpack.c.l.b16 %v1706
    %v1869 = vunpack.c.h.b16 %v1706
    %v1870 = vunpack.c.l.b16 %v1707
    %v1871 = vunpack.c.h.b16 %v1707
    %v1872 = vunpack.c.l.b16 %v1708
    %v1873 = vunpack.c.h.b16 %v1708
    %v1874 = vunpack.c.l.b16 %v1709
    %v1875 = vunpack.c.h.b16 %v1709
    %v1876 = vunpack.c.l.b16 %v1710
    %v1877 = vunpack.c.h.b16 %v1710
    %v1878 = vunpack.c.l.b16 %v1711
    %v1879 = vunpack.c.h.b16 %v1711
    %v1880 = vunpack.c.l.b16 %v1712
    %v1881 = vunpack.c.h.b16 %v1712
    %v1882 = vunpack.c.l.b16 %v1713
    %v1883 = vunpack.c.h.b16 %v1713
    %v1884 = vunpack.c.l.b16 %v1714
    %v1885 = vunpack.c.h.b16 %v1714
    %v1886 = vunpack.c.l.b16 %v1715
    %v1887 = vunpack.c.h.b16 %v1715
    %v1888 = vunpack.c.l.b16 %v1716
    %v1889 = vunpack.c.h.b16 %v1716
    %v1890 = vunpack.c.l.b16 %v1717
    %v1891 = vunpack.c.h.b16 %v1717
    %v1892 = vunpack.c.l.b16 %v1718
    %v1893 = vunpack.c.h.b16 %v1718
    %v1894 = vunpack.c.l.b16 %v1719
    %v1895 = vunpack.c.h.b16 %v1719
    %v1896 = vunpack.c.l.b16 %v1720
    %v1897 = vunpack.c.h.b16 %v1720
    %v1898 = vunpack.c.l.b16 %v1721
    %v1899 = vunpack.c.h.b16 %v1721
    %v1900 = vunpack.c.l.b16 %v1722
    %v1901 = vunpack.c.h.b16 %v1722
    %v1902 = vunpack.c.l.b16 %v1723
    %v1903 = vunpack.c.h.b16 %v1723
    %v1904 = vunpack.c.l.b16 %v1724
    %v1905 = vunpack.c.h.b16 %v1724
    %v1906 = vunpack.c.l.b16 %v1725
    %v1907 = vunpack.c.h.b16 %v1725
    %v1908 = vunpack.c.l.b16 %v1726
    %v1909 = vunpack.c.h.b16 %v1726
    %v1910 = vunpack.c.l.b16 %v1727
    %v1911 = vunpack.c.h.b16 %v1727
    %v1912 = vunpack.c.l.b16 %v1728
    %v1913 = vunpack.c.h.b16 %v1728
    %v1914 = vunpack.c.l.b16 %v1729
    %v1915 = vunpack.c.h.b16 %v1729
    %v1916 = vunpack.c.l.b16 %v1730
    %v1917 = vunpack.c.h.b16 %v1730
    %v1918 = vunpack.c.l.b16 %v1731
    %v1919 = vunpack.c.h.b16 %v1731
    %v1920 = vunpack.c.l.b16 %v1732
    %v1921 = vunpack.c.h.b16 %v1732
    %v1922 = vunpack.c.l.b16 %v1733
    %v1923 = vunpack.c.h.b16 %v1733
    %v1924 = vunpack.c.l.b16 %v1734
    %v1925 = vunpack.c.h.b16 %v1734
    %v1926 = vunpack.c.l.b16 %v1735
    %v1927 = vunpack.c.h.b16 %v1735
    %v1928 = vunpack.c.l.b16 %v1736
    %v1929 = vunpack.c.h.b16 %v1736
    %v1930 = vunpack.c.l.b16 %v1737
    %v1931 = vunpack.c.h.b16 %v1737
    %v1932 = vunpack.c.l.b16 %v1738
    %v1933 = vunpack.c.h.b16 %v1738
    %v1934 = vunpack.c.l.b16 %v1739
    %v1935 = vunpack.c.h.b16 %v1739
    %v1936 = vunpack.c.l.b16 %v1740
    %v1937 = vunpack.c.h.b16 %v1740
    %v1938 = vunpack.c.l.b16 %v1741
    %v1939 = vunpack.c.h.b16 %v1741
    %v1940 = vunpack.c.l.b16 %v1742
    %v1941 = vunpack.c.h.b16 %v1742
    %v1942 = vunpack.c.l.b16 %v1743
    %v1943 = vunpack.c.h.b16 %v1743
    %v1944 = vunpack.c.l.b16 %v1744
    %v1945 = vunpack.c.h.b16 %v1744
    %v1946 = vunpack.c.l.b16 %v1745
    %v1947 = vunpack.c.h.b16 %v1745
    %v1948 = vunpack.c.l.b16 %v1746
    %v1949 = vunpack.c.h.b16 %v1746
    %v1950 = vunpack.c.l.b16 %v1747
    %v1951 = vunpack.c.h.b16 %v1747
    %v1952 = vunpack.c.l.b16 %v1748
    %v1953 = vunpack.c.h.b16 %v1748
    %v1954 = vunpack.c.l.b16 %v1749
    %v1955 = vunpack.c.h.b16 %v1749
    %v1956 = vunpack.c.l.b16 %v1750
    %v1957 = vunpack.c.h.b16 %v1750
    %v1958 = vunpack.c.l.b16 %v1751
    %v1959 = vunpack.c.h.b16 %v1751
    %v1960 = vunpack.c.l.b16 %v1752
    %v1961 = vunpack.c.h.b16 %v1752
    %v1962 = vunpack.c.l.b16 %v1753
    %v1963 = vunpack.c.h.b16 %v1753
    %v1964 = vunpack.c.l.b16 %v1754
    %v1965 = vunpack.c.h.b16 %v1754
    %v1966 = vunpack.c.l.b16 %v1755
    %v1967 = vunpack.c.h.b16 %v1755
    %v1968 = vunpack.c.l.b16 %v1756
    %v1969 = vunpack.c.h.b16 %v1756
    %v1970 = vunpack.c.l.b16 %v1757
    %v1971 = vunpack.c.h.b16 %v1757
    %v1972 = vunpack.c.l.b16 %v1758
    %v1973 = vunpack.c.h.b16 %v1758
    %v1974 = vunpack.c.l.b16 %v1759
    %v1975 = vunpack.c.h.b16 %v1759
    %v1976 = vunpack.c.l.b16 %v1760
    %v1977 = vunpack.c.h.b16 %v1760
    %v1978 = vpack.c.b16 %v1854, %v1850
    %v1979 = vpack.c.b16 %v1855, %v1851
    %v1980 = vpack.c.b16 %v1856, %v1852
    %v1981 = vpack.c.b16 %v1857, %v1853
    %v1982 = vpack.c.b16 %v1862, %v1858
    %v1983 = vpack.c.b16 %v1863, %v1859
    %v1984 = vpack.c.b16 %v1864, %v1860
    %v1985 = vpack.c.b16 %v1865, %v1861
    %v1986 = vpack.c.b16 %v1870, %v1866
    %v1987 = vpack.c.b16 %v1871, %v1867
    %v1988 = vpack.c.b16 %v1872, %v1868
    %v1989 = vpack.c.b16 %v1873, %v1869
    %v1990 = vpack.c.b16 %v1878, %v1874
    %v1991 = vpack.c.b16 %v1879, %v1875
    %v1992 = vpack.c.b16 %v1880, %v1876
    %v1993 = vpack.c.b16 %v1881, %v1877
    %v1994 = vpack.c.b16 %v1886, %v1882
    %v1995 = vpack.c.b16 %v1887, %v1883
    %v1996 = vpack.c.b16 %v1888, %v1884
    %v1997 = vpack.c.b16 %v1889, %v1885
    %v1998 = vpack.c.b16 %v1894, %v1890
    %v1999 = vpack.c.b16 %v1895, %v1891
    %v2000 = vpack.c.b16 %v1896, %v1892
    %v2001 = vpack.c.b16 %v1897, %v1893
    %v2002 = vpack.c.b16 %v1902, %v1898
    %v2003 = vpack.c.b16 %v1903, %v1899
    %v2004 = vpack.c.b16 %v1904, %v1900
    %v2005 = vpack.c.b16 %v1905, %v1901
    %v2006 = vpack.c.b16 %v1910, %v1906
    %v2007 = vpack.c.b16 %v1911, %v1907
    %v2008 = vpack.c.b16 %v1912, %v1908
    %v2009 = vpack.c.b16 %v1913, %v1909
    %v2010 = vpack.c.b16 %v1918, %v1914
    %v2011 = vpack.c.b16 %v1919, %v1915
    %v2012 = vpack.c.b16 %v1920, %v1916
    %v2013 = vpack.c.b16 %v1921, %v1917
    %v2014 = vpack.c.b16 %v1926, %v1922
    %v2015 = vpack.c.b16 %v1927, %v1923
    %v2016 = vpack.c.b16 %v1928, %v1924
    %v2017 = vpack.c.b16 %v1929, %v1925
    %v2018 = vpack.c.b16 %v1934, %v1930
    %v2019 = vpack.c.b16 %v1935, %v1931
    %v2020 = vpack.c.b16 %v1936, %v1932
    %v2021 = vpack.c.b16 %v1937, %v1933
    %v2022 = vpack.c.b16 %v1942, %v1938
    %v2023 = vpack.c.b16 %v1943, %v1939
    %v2024 = vpack.c.b16 %v1944, %v1940
    %v2025 = vpack.c.b16 %v1945, %v1941
    %v2026 = vpack.c.b16 %v1950, %v1946
    %v2027 = vpack.c.b16 %v1951, %v1947
    %v2028 = vpack.c.b16 %v1952, %v1948
    %v2029 = vpack.c.b16 %v1953, %v1949
    %v2030 = vpack.c.b16 %v1958, %v1954
    %v2031 = vpack.c.b16 %v1959, %v1955
    %v2032 = vpack.c.b16 %v1960, %v1956
    %v2033 = vpack.c.b16 %v1961, %v1957
    %v2034 = vpack.c.b16 %v1966, %v1962
    %v2035 = vpack.c.b16 %v1967, %v1963
    %v2036 = vpack.c.b16 %v1968, %v1964
    %v2037 = vpack.c.b16 %v1969, %v1965
    %v2038 = vpack.c.b16 %v1974, %v1970
    %v2039 = vpack.c.b16 %v1975, %v1971
    %v2040 = vpack.c.b16 %v1976, %v1972
    %v2041 = vpack.c.b16 %v1977, %v1973
    %2106 = vmatprep.subr.bf16.mxu0 %v1979
    %2107 = vmatpush1.bf16.msra.mxu0 %v1978
    %2108 = vmatprep.subr.bf16.mxu0 %v1983
    %2109 = vmatpush1.bf16.msra.mxu0 %v1982
    %2110 = vmatprep.subr.bf16.mxu0 %v1987
    %2111 = vmatpush1.bf16.msra.mxu0 %v1986
    %2112 = vmatprep.subr.bf16.mxu0 %v1991
    %2113 = vmatpush1.bf16.msra.mxu0 %v1990
    %2114 = vmatprep.subr.bf16.mxu0 %v1995
    %2115 = vmatpush1.bf16.msra.mxu0 %v1994
    %2116 = vmatprep.subr.bf16.mxu0 %v1999
    %2117 = vmatpush1.bf16.msra.mxu0 %v1998
    %2118 = vmatprep.subr.bf16.mxu0 %v2003
    %2119 = vmatpush1.bf16.msra.mxu0 %v2002
    %2120 = vmatprep.subr.bf16.mxu0 %v2007
    %2121 = vmatpush1.bf16.msra.mxu0 %v2006
    %2122 = vmatprep.subr.bf16.mxu0 %v2011
    %2123 = vmatpush1.bf16.msra.mxu0 %v2010
    %2124 = vmatprep.subr.bf16.mxu0 %v2015
    %2125 = vmatpush1.bf16.msra.mxu0 %v2014
    %2126 = vmatprep.subr.bf16.mxu0 %v2019
    %2127 = vmatpush1.bf16.msra.mxu0 %v2018
    %2128 = vmatprep.subr.bf16.mxu0 %v2023
    %2129 = vmatpush1.bf16.msra.mxu0 %v2022
    %2130 = vmatprep.subr.bf16.mxu0 %v2027
    %2131 = vmatpush1.bf16.msra.mxu0 %v2026
    %2132 = vmatprep.subr.bf16.mxu0 %v2031
    %2133 = vmatpush1.bf16.msra.mxu0 %v2030
    %2134 = vmatprep.subr.bf16.mxu0 %v2035
    %2135 = vmatpush1.bf16.msra.mxu0 %v2034
    %2136 = vmatprep.subr.bf16.mxu0 %v2039
    %2137 = vmatpush1.bf16.msra.mxu0 %v2038
    %2138 = vmatprep.mubr.bf16.mxu0 %v1764
    %2139 = vmatmul.mubr.bf16.gmra.mrb[0].mxu0 %v1763
    %v2140 = vpop.f32.mrb[0].mxu0
    %v2141 = vadd.f32 %v1769, %v2140
    %v2142 = vpop.f32.mrb[0].mxu0
    %v2143 = vadd.f32 %v1773, %v2142
    %v2144 = vpop.f32.mrb[0].mxu0
    %v2145 = vpop.f32.mrb[0].mxu0
    %2146 = vdwg.mxu0
    %2147 = vmatprep.subr.bf16.mxu0 %v1981
    %2148 = vmatpush1.bf16.msra.mxu0 %v1980
    %2149 = vmatprep.subr.bf16.mxu0 %v1985
    %2150 = vmatpush1.bf16.msra.mxu0 %v1984
    %2151 = vmatprep.subr.bf16.mxu0 %v1989
    %2152 = vmatpush1.bf16.msra.mxu0 %v1988
    %2153 = vmatprep.subr.bf16.mxu0 %v1993
    %2154 = vmatpush1.bf16.msra.mxu0 %v1992
    %2155 = vmatprep.subr.bf16.mxu0 %v1997
    %2156 = vmatpush1.bf16.msra.mxu0 %v1996
    %2157 = vmatprep.subr.bf16.mxu0 %v2001
    %2158 = vmatpush1.bf16.msra.mxu0 %v2000
    %2159 = vmatprep.subr.bf16.mxu0 %v2005
    %2160 = vmatpush1.bf16.msra.mxu0 %v2004
    %2161 = vmatprep.subr.bf16.mxu0 %v2009
    %2162 = vmatpush1.bf16.msra.mxu0 %v2008
    %2163 = vmatprep.subr.bf16.mxu0 %v2013
    %2164 = vmatpush1.bf16.msra.mxu0 %v2012
    %2165 = vmatprep.subr.bf16.mxu0 %v2017
    %2166 = vmatpush1.bf16.msra.mxu0 %v2016
    %2167 = vmatprep.subr.bf16.mxu0 %v2021
    %2168 = vmatpush1.bf16.msra.mxu0 %v2020
    %2169 = vmatprep.subr.bf16.mxu0 %v2025
    %2170 = vmatpush1.bf16.msra.mxu0 %v2024
    %2171 = vmatprep.subr.bf16.mxu0 %v2029
    %2172 = vmatpush1.bf16.msra.mxu0 %v2028
    %2173 = vmatprep.subr.bf16.mxu0 %v2033
    %2174 = vmatpush1.bf16.msra.mxu0 %v2032
    %2175 = vmatprep.subr.bf16.mxu0 %v2037
    %2176 = vmatpush1.bf16.msra.mxu0 %v2036
    %2177 = vmatprep.subr.bf16.mxu0 %v2041
    %2178 = vmatpush1.bf16.msra.mxu0 %v2040
    %2179 = vmatprep.mubr.bf16.mxu0 %v1764
    %2180 = vmatmul.mubr.bf16.gmra.mrb[0].mxu0 %v1763
    %v2181 = vpop.f32.mrb[0].mxu0
    %v2182 = vadd.f32 %v1777, %v2181
    %v2183 = vpop.f32.mrb[0].mxu0
    %v2184 = vadd.f32 %v1781, %v2183
    %v2185 = vpop.f32.mrb[0].mxu0
    %v2186 = vpop.f32.mrb[0].mxu0
    %2187 = vdwg.mxu0
    %v2188 = vmax.f32 %v2141, 0.0
    %v2189 = vmax.f32 %v2143, 0.0
    %v2190 = vmax.f32 %v2182, 0.0
    %v2191 = vmax.f32 %v2184, 0.0
    %v2192 = vld [vmem:[#allocation7 + $0x490] sm:$0xff]
    %v2193 = vld [vmem:[#allocation7 + $0x498] sm:$0xff]
    %v2194 = vld [vmem:[#allocation7 + $0x4a0] sm:$0xff]
    %v2195 = vld [vmem:[#allocation7 + $0x4a8] sm:$0xff]
    %v2196 = vld [vmem:[#allocation7 + $0x4b0] sm:$0xff]
    %v2197 = vld [vmem:[#allocation7 + $0x4b8] sm:$0xff]
    %v2198 = vld [vmem:[#allocation7 + $0x4c0] sm:$0xff]
    %v2199 = vld [vmem:[#allocation7 + $0x4c8] sm:$0xff]
    %v2200 = vld [vmem:[#allocation7 + $0x4d0] sm:$0xff]
    %v2201 = vld [vmem:[#allocation7 + $0x4d8] sm:$0xff]
    %v2202 = vld [vmem:[#allocation7 + $0x4e0] sm:$0xff]
    %v2203 = vld [vmem:[#allocation7 + $0x4e8] sm:$0xff]
    %v2204 = vld [vmem:[#allocation7 + $0x4f0] sm:$0xff]
    %v2205 = vld [vmem:[#allocation7 + $0x4f8] sm:$0xff]
    %v2206 = vld [vmem:[#allocation7 + $0x500] sm:$0xff]
    %v2207 = vld [vmem:[#allocation7 + $0x508] sm:$0xff]
    %v2208 = vld [vmem:[#allocation7 + $0x510] sm:$0xff]
    %v2209 = vld [vmem:[#allocation7 + $0x518] sm:$0xff]
    %v2210 = vld [vmem:[#allocation7 + $0x520] sm:$0xff]
    %v2211 = vld [vmem:[#allocation7 + $0x528] sm:$0xff]
    %v2212 = vld [vmem:[#allocation7 + $0x530] sm:$0xff]
    %v2213 = vld [vmem:[#allocation7 + $0x538] sm:$0xff]
    %v2214 = vld [vmem:[#allocation7 + $0x540] sm:$0xff]
    %v2215 = vld [vmem:[#allocation7 + $0x548] sm:$0xff]
    %v2216 = vld [vmem:[#allocation7 + $0x550] sm:$0xff]
    %v2217 = vld [vmem:[#allocation7 + $0x558] sm:$0xff]
    %v2218 = vld [vmem:[#allocation7 + $0x560] sm:$0xff]
    %v2219 = vld [vmem:[#allocation7 + $0x568] sm:$0xff]
    %v2220 = vld [vmem:[#allocation7 + $0x570] sm:$0xff]
    %v2221 = vld [vmem:[#allocation7 + $0x578] sm:$0xff]
    %v2222 = vld [vmem:[#allocation7 + $0x580] sm:$0xff]
    %v2223 = vld [vmem:[#allocation7 + $0x588] sm:$0xff]
    %v2224 = vld [vmem:[#allocation7 + $0x590] sm:$0xff]
    %v2225 = vld [vmem:[#allocation7 + $0x598] sm:$0xff]
    %v2226 = vld [vmem:[#allocation7 + $0x5a0] sm:$0xff]
    %v2227 = vld [vmem:[#allocation7 + $0x5a8] sm:$0xff]
    %v2228 = vld [vmem:[#allocation7 + $0x5b0] sm:$0xff]
    %v2229 = vld [vmem:[#allocation7 + $0x5b8] sm:$0xff]
    %v2230 = vld [vmem:[#allocation7 + $0x5c0] sm:$0xff]
    %v2231 = vld [vmem:[#allocation7 + $0x5c8] sm:$0xff]
    %v2232 = vld [vmem:[#allocation7 + $0x5d0] sm:$0xff]
    %v2233 = vld [vmem:[#allocation7 + $0x5d8] sm:$0xff]
    %v2234 = vld [vmem:[#allocation7 + $0x5e0] sm:$0xff]
    %v2235 = vld [vmem:[#allocation7 + $0x5e8] sm:$0xff]
    %v2236 = vld [vmem:[#allocation7 + $0x5f0] sm:$0xff]
    %v2237 = vld [vmem:[#allocation7 + $0x5f8] sm:$0xff]
    %v2238 = vld [vmem:[#allocation7 + $0x600] sm:$0xff]
    %v2239 = vld [vmem:[#allocation7 + $0x608] sm:$0xff]
    %v2240 = vld [vmem:[#allocation7 + $0x610] sm:$0xff]
    %v2241 = vld [vmem:[#allocation7 + $0x618] sm:$0xff]
    %v2242 = vld [vmem:[#allocation7 + $0x620] sm:$0xff]
    %v2243 = vld [vmem:[#allocation7 + $0x628] sm:$0xff]
    %v2244 = vld [vmem:[#allocation7 + $0x630] sm:$0xff]
    %v2245 = vld [vmem:[#allocation7 + $0x638] sm:$0xff]
    %v2246 = vld [vmem:[#allocation7 + $0x640] sm:$0xff]
    %v2247 = vld [vmem:[#allocation7 + $0x648] sm:$0xff]
    %v2248 = vld [vmem:[#allocation7 + $0x650] sm:$0xff]
    %v2249 = vld [vmem:[#allocation7 + $0x658] sm:$0xff]
    %v2250 = vld [vmem:[#allocation7 + $0x660] sm:$0xff]
    %v2251 = vld [vmem:[#allocation7 + $0x668] sm:$0xff]
    %v2252 = vld [vmem:[#allocation7 + $0x670] sm:$0xff]
    %v2253 = vld [vmem:[#allocation7 + $0x678] sm:$0xff]
    %v2254 = vld [vmem:[#allocation7 + $0x680] sm:$0xff]
    %v2255 = vld [vmem:[#allocation7 + $0x688] sm:$0xff]
    %s2256 = scalar_lea.vmem [#allocation8], 33
    %v2257 = vld [vmem:[%s2256] ss:$8 sm:$0x3]
    %v2258 = vpack.c.bf16 %v2188, %v2188
    %v2259 = vpack.c.bf16 %v2189, %v2189
    %v2260 = vpack.c.bf16 %v2190, %v2190
    %v2261 = vpack.c.bf16 %v2191, %v2191
    %v2263 = vlaneseq
    %v2264 = vshrl.u32 %v2263, 7
    %v2265 = vsub.s32 0, %v2264
    %v2266 = vrot.slane %v2257, %v2265
    %v2267 = vlaneseq
    %v2268 = vshrl.u32 %v2267, 7
    %v2269 = vsub.s32 1, %v2268
    %v2270 = vrot.slane %v2257, %v2269
    %v2337 = vunpack.c.l.b16 %v2192
    %v2338 = vunpack.c.h.b16 %v2192
    %v2339 = vunpack.c.l.b16 %v2193
    %v2340 = vunpack.c.h.b16 %v2193
    %v2341 = vunpack.c.l.b16 %v2194
    %v2342 = vunpack.c.h.b16 %v2194
    %v2343 = vunpack.c.l.b16 %v2195
    %v2344 = vunpack.c.h.b16 %v2195
    %v2345 = vunpack.c.l.b16 %v2196
    %v2346 = vunpack.c.h.b16 %v2196
    %v2347 = vunpack.c.l.b16 %v2197
    %v2348 = vunpack.c.h.b16 %v2197
    %v2349 = vunpack.c.l.b16 %v2198
    %v2350 = vunpack.c.h.b16 %v2198
    %v2351 = vunpack.c.l.b16 %v2199
    %v2352 = vunpack.c.h.b16 %v2199
    %v2353 = vunpack.c.l.b16 %v2200
    %v2354 = vunpack.c.h.b16 %v2200
    %v2355 = vunpack.c.l.b16 %v2201
    %v2356 = vunpack.c.h.b16 %v2201
    %v2357 = vunpack.c.l.b16 %v2202
    %v2358 = vunpack.c.h.b16 %v2202
    %v2359 = vunpack.c.l.b16 %v2203
    %v2360 = vunpack.c.h.b16 %v2203
    %v2361 = vunpack.c.l.b16 %v2204
    %v2362 = vunpack.c.h.b16 %v2204
    %v2363 = vunpack.c.l.b16 %v2205
    %v2364 = vunpack.c.h.b16 %v2205
    %v2365 = vunpack.c.l.b16 %v2206
    %v2366 = vunpack.c.h.b16 %v2206
    %v2367 = vunpack.c.l.b16 %v2207
    %v2368 = vunpack.c.h.b16 %v2207
    %v2369 = vunpack.c.l.b16 %v2208
    %v2370 = vunpack.c.h.b16 %v2208
    %v2371 = vunpack.c.l.b16 %v2209
    %v2372 = vunpack.c.h.b16 %v2209
    %v2373 = vunpack.c.l.b16 %v2210
    %v2374 = vunpack.c.h.b16 %v2210
    %v2375 = vunpack.c.l.b16 %v2211
    %v2376 = vunpack.c.h.b16 %v2211
    %v2377 = vunpack.c.l.b16 %v2212
    %v2378 = vunpack.c.h.b16 %v2212
    %v2379 = vunpack.c.l.b16 %v2213
    %v2380 = vunpack.c.h.b16 %v2213
    %v2381 = vunpack.c.l.b16 %v2214
    %v2382 = vunpack.c.h.b16 %v2214
    %v2383 = vunpack.c.l.b16 %v2215
    %v2384 = vunpack.c.h.b16 %v2215
    %v2385 = vunpack.c.l.b16 %v2216
    %v2386 = vunpack.c.h.b16 %v2216
    %v2387 = vunpack.c.l.b16 %v2217
    %v2388 = vunpack.c.h.b16 %v2217
    %v2389 = vunpack.c.l.b16 %v2218
    %v2390 = vunpack.c.h.b16 %v2218
    %v2391 = vunpack.c.l.b16 %v2219
    %v2392 = vunpack.c.h.b16 %v2219
    %v2393 = vunpack.c.l.b16 %v2220
    %v2394 = vunpack.c.h.b16 %v2220
    %v2395 = vunpack.c.l.b16 %v2221
    %v2396 = vunpack.c.h.b16 %v2221
    %v2397 = vunpack.c.l.b16 %v2222
    %v2398 = vunpack.c.h.b16 %v2222
    %v2399 = vunpack.c.l.b16 %v2223
    %v2400 = vunpack.c.h.b16 %v2223
    %v2401 = vunpack.c.l.b16 %v2224
    %v2402 = vunpack.c.h.b16 %v2224
    %v2403 = vunpack.c.l.b16 %v2225
    %v2404 = vunpack.c.h.b16 %v2225
    %v2405 = vunpack.c.l.b16 %v2226
    %v2406 = vunpack.c.h.b16 %v2226
    %v2407 = vunpack.c.l.b16 %v2227
    %v2408 = vunpack.c.h.b16 %v2227
    %v2409 = vunpack.c.l.b16 %v2228
    %v2410 = vunpack.c.h.b16 %v2228
    %v2411 = vunpack.c.l.b16 %v2229
    %v2412 = vunpack.c.h.b16 %v2229
    %v2413 = vunpack.c.l.b16 %v2230
    %v2414 = vunpack.c.h.b16 %v2230
    %v2415 = vunpack.c.l.b16 %v2231
    %v2416 = vunpack.c.h.b16 %v2231
    %v2417 = vunpack.c.l.b16 %v2232
    %v2418 = vunpack.c.h.b16 %v2232
    %v2419 = vunpack.c.l.b16 %v2233
    %v2420 = vunpack.c.h.b16 %v2233
    %v2421 = vunpack.c.l.b16 %v2234
    %v2422 = vunpack.c.h.b16 %v2234
    %v2423 = vunpack.c.l.b16 %v2235
    %v2424 = vunpack.c.h.b16 %v2235
    %v2425 = vunpack.c.l.b16 %v2236
    %v2426 = vunpack.c.h.b16 %v2236
    %v2427 = vunpack.c.l.b16 %v2237
    %v2428 = vunpack.c.h.b16 %v2237
    %v2429 = vunpack.c.l.b16 %v2238
    %v2430 = vunpack.c.h.b16 %v2238
    %v2431 = vunpack.c.l.b16 %v2239
    %v2432 = vunpack.c.h.b16 %v2239
    %v2433 = vunpack.c.l.b16 %v2240
    %v2434 = vunpack.c.h.b16 %v2240
    %v2435 = vunpack.c.l.b16 %v2241
    %v2436 = vunpack.c.h.b16 %v2241
    %v2437 = vunpack.c.l.b16 %v2242
    %v2438 = vunpack.c.h.b16 %v2242
    %v2439 = vunpack.c.l.b16 %v2243
    %v2440 = vunpack.c.h.b16 %v2243
    %v2441 = vunpack.c.l.b16 %v2244
    %v2442 = vunpack.c.h.b16 %v2244
    %v2443 = vunpack.c.l.b16 %v2245
    %v2444 = vunpack.c.h.b16 %v2245
    %v2445 = vunpack.c.l.b16 %v2246
    %v2446 = vunpack.c.h.b16 %v2246
    %v2447 = vunpack.c.l.b16 %v2247
    %v2448 = vunpack.c.h.b16 %v2247
    %v2449 = vunpack.c.l.b16 %v2248
    %v2450 = vunpack.c.h.b16 %v2248
    %v2451 = vunpack.c.l.b16 %v2249
    %v2452 = vunpack.c.h.b16 %v2249
    %v2453 = vunpack.c.l.b16 %v2250
    %v2454 = vunpack.c.h.b16 %v2250
    %v2455 = vunpack.c.l.b16 %v2251
    %v2456 = vunpack.c.h.b16 %v2251
    %v2457 = vunpack.c.l.b16 %v2252
    %v2458 = vunpack.c.h.b16 %v2252
    %v2459 = vunpack.c.l.b16 %v2253
    %v2460 = vunpack.c.h.b16 %v2253
    %v2461 = vunpack.c.l.b16 %v2254
    %v2462 = vunpack.c.h.b16 %v2254
    %v2463 = vunpack.c.l.b16 %v2255
    %v2464 = vunpack.c.h.b16 %v2255
    %v2465 = vpack.c.b16 %v2339, %v2337
    %v2466 = vpack.c.b16 %v2340, %v2338
    %v2467 = vpack.c.b16 %v2343, %v2341
    %v2468 = vpack.c.b16 %v2344, %v2342
    %v2469 = vpack.c.b16 %v2347, %v2345
    %v2470 = vpack.c.b16 %v2348, %v2346
    %v2471 = vpack.c.b16 %v2351, %v2349
    %v2472 = vpack.c.b16 %v2352, %v2350
    %v2473 = vpack.c.b16 %v2355, %v2353
    %v2474 = vpack.c.b16 %v2356, %v2354
    %v2475 = vpack.c.b16 %v2359, %v2357
    %v2476 = vpack.c.b16 %v2360, %v2358
    %v2477 = vpack.c.b16 %v2363, %v2361
    %v2478 = vpack.c.b16 %v2364, %v2362
    %v2479 = vpack.c.b16 %v2367, %v2365
    %v2480 = vpack.c.b16 %v2368, %v2366
    %v2481 = vpack.c.b16 %v2371, %v2369
    %v2482 = vpack.c.b16 %v2372, %v2370
    %v2483 = vpack.c.b16 %v2375, %v2373
    %v2484 = vpack.c.b16 %v2376, %v2374
    %v2485 = vpack.c.b16 %v2379, %v2377
    %v2486 = vpack.c.b16 %v2380, %v2378
    %v2487 = vpack.c.b16 %v2383, %v2381
    %v2488 = vpack.c.b16 %v2384, %v2382
    %v2489 = vpack.c.b16 %v2387, %v2385
    %v2490 = vpack.c.b16 %v2388, %v2386
    %v2491 = vpack.c.b16 %v2391, %v2389
    %v2492 = vpack.c.b16 %v2392, %v2390
    %v2493 = vpack.c.b16 %v2395, %v2393
    %v2494 = vpack.c.b16 %v2396, %v2394
    %v2495 = vpack.c.b16 %v2399, %v2397
    %v2496 = vpack.c.b16 %v2400, %v2398
    %v2497 = vpack.c.b16 %v2403, %v2401
    %v2498 = vpack.c.b16 %v2404, %v2402
    %v2499 = vpack.c.b16 %v2407, %v2405
    %v2500 = vpack.c.b16 %v2408, %v2406
    %v2501 = vpack.c.b16 %v2411, %v2409
    %v2502 = vpack.c.b16 %v2412, %v2410
    %v2503 = vpack.c.b16 %v2415, %v2413
    %v2504 = vpack.c.b16 %v2416, %v2414
    %v2505 = vpack.c.b16 %v2419, %v2417
    %v2506 = vpack.c.b16 %v2420, %v2418
    %v2507 = vpack.c.b16 %v2423, %v2421
    %v2508 = vpack.c.b16 %v2424, %v2422
    %v2509 = vpack.c.b16 %v2427, %v2425
    %v2510 = vpack.c.b16 %v2428, %v2426
    %v2511 = vpack.c.b16 %v2431, %v2429
    %v2512 = vpack.c.b16 %v2432, %v2430
    %v2513 = vpack.c.b16 %v2435, %v2433
    %v2514 = vpack.c.b16 %v2436, %v2434
    %v2515 = vpack.c.b16 %v2439, %v2437
    %v2516 = vpack.c.b16 %v2440, %v2438
    %v2517 = vpack.c.b16 %v2443, %v2441
    %v2518 = vpack.c.b16 %v2444, %v2442
    %v2519 = vpack.c.b16 %v2447, %v2445
    %v2520 = vpack.c.b16 %v2448, %v2446
    %v2521 = vpack.c.b16 %v2451, %v2449
    %v2522 = vpack.c.b16 %v2452, %v2450
    %v2523 = vpack.c.b16 %v2455, %v2453
    %v2524 = vpack.c.b16 %v2456, %v2454
    %v2525 = vpack.c.b16 %v2459, %v2457
    %v2526 = vpack.c.b16 %v2460, %v2458
    %v2527 = vpack.c.b16 %v2463, %v2461
    %v2528 = vpack.c.b16 %v2464, %v2462
    %2593 = vmatprep.subr.bf16.mxu0 %v2466
    %2594 = vmatpush1.bf16.msra.mxu0 %v2465
    %2595 = vmatprep.subr.bf16.mxu0 %v2468
    %2596 = vmatpush1.bf16.msra.mxu0 %v2467
    %2597 = vmatprep.subr.bf16.mxu0 %v2470
    %2598 = vmatpush1.bf16.msra.mxu0 %v2469
    %2599 = vmatprep.subr.bf16.mxu0 %v2472
    %2600 = vmatpush1.bf16.msra.mxu0 %v2471
    %2601 = vmatprep.subr.bf16.mxu0 %v2474
    %2602 = vmatpush1.bf16.msra.mxu0 %v2473
    %2603 = vmatprep.subr.bf16.mxu0 %v2476
    %2604 = vmatpush1.bf16.msra.mxu0 %v2475
    %2605 = vmatprep.subr.bf16.mxu0 %v2478
    %2606 = vmatpush1.bf16.msra.mxu0 %v2477
    %2607 = vmatprep.subr.bf16.mxu0 %v2480
    %2608 = vmatpush1.bf16.msra.mxu0 %v2479
    %2609 = vmatprep.subr.bf16.mxu0 %v2482
    %2610 = vmatpush1.bf16.msra.mxu0 %v2481
    %2611 = vmatprep.subr.bf16.mxu0 %v2484
    %2612 = vmatpush1.bf16.msra.mxu0 %v2483
    %2613 = vmatprep.subr.bf16.mxu0 %v2486
    %2614 = vmatpush1.bf16.msra.mxu0 %v2485
    %2615 = vmatprep.subr.bf16.mxu0 %v2488
    %2616 = vmatpush1.bf16.msra.mxu0 %v2487
    %2617 = vmatprep.subr.bf16.mxu0 %v2490
    %2618 = vmatpush1.bf16.msra.mxu0 %v2489
    %2619 = vmatprep.subr.bf16.mxu0 %v2492
    %2620 = vmatpush1.bf16.msra.mxu0 %v2491
    %2621 = vmatprep.subr.bf16.mxu0 %v2494
    %2622 = vmatpush1.bf16.msra.mxu0 %v2493
    %2623 = vmatprep.subr.bf16.mxu0 %v2496
    %2624 = vmatpush1.bf16.msra.mxu0 %v2495
    %2625 = vmatprep.mubr.bf16.mxu0 %v2259
    %2626 = vmatmul.mubr.bf16.gmra.mrb[0].mxu0 %v2258
    %v2627 = vpop.f32.mrb[0].mxu0
    %v2628 = vadd.f32 %v2266, %v2627
    %v2629 = vpop.f32.mrb[0].mxu0
    %v2630 = vadd.f32 %v2270, %v2629
    %v2631 = vpop.f32.mrb[0].mxu0
    %v2632 = vpop.f32.mrb[0].mxu0
    %2633 = vdwg.mxu0
    %2634 = vmatprep.subr.bf16.mxu0 %v2498
    %2635 = vmatpush1.bf16.msra.mxu0 %v2497
    %2636 = vmatprep.subr.bf16.mxu0 %v2500
    %2637 = vmatpush1.bf16.msra.mxu0 %v2499
    %2638 = vmatprep.subr.bf16.mxu0 %v2502
    %2639 = vmatpush1.bf16.msra.mxu0 %v2501
    %2640 = vmatprep.subr.bf16.mxu0 %v2504
    %2641 = vmatpush1.bf16.msra.mxu0 %v2503
    %2642 = vmatprep.subr.bf16.mxu0 %v2506
    %2643 = vmatpush1.bf16.msra.mxu0 %v2505
    %2644 = vmatprep.subr.bf16.mxu0 %v2508
    %2645 = vmatpush1.bf16.msra.mxu0 %v2507
    %2646 = vmatprep.subr.bf16.mxu0 %v2510
    %2647 = vmatpush1.bf16.msra.mxu0 %v2509
    %2648 = vmatprep.subr.bf16.mxu0 %v2512
    %2649 = vmatpush1.bf16.msra.mxu0 %v2511
    %2650 = vmatprep.subr.bf16.mxu0 %v2514
    %2651 = vmatpush1.bf16.msra.mxu0 %v2513
    %2652 = vmatprep.subr.bf16.mxu0 %v2516
    %2653 = vmatpush1.bf16.msra.mxu0 %v2515
    %2654 = vmatprep.subr.bf16.mxu0 %v2518
    %2655 = vmatpush1.bf16.msra.mxu0 %v2517
    %2656 = vmatprep.subr.bf16.mxu0 %v2520
    %2657 = vmatpush1.bf16.msra.mxu0 %v2519
    %2658 = vmatprep.subr.bf16.mxu0 %v2522
    %2659 = vmatpush1.bf16.msra.mxu0 %v2521
    %2660 = vmatprep.subr.bf16.mxu0 %v2524
    %2661 = vmatpush1.bf16.msra.mxu0 %v2523
    %2662 = vmatprep.subr.bf16.mxu0 %v2526
    %2663 = vmatpush1.bf16.msra.mxu0 %v2525
    %2664 = vmatprep.subr.bf16.mxu0 %v2528
    %2665 = vmatpush1.bf16.msra.mxu0 %v2527
    %2666 = vmatprep.mubr.bf16.mxu0 %v2261
    %2667 = vmatmul.mubr.bf16.gmra.mrb[0].mxu0 %v2260
    %v2668 = vpop.f32.mrb[0].mxu0
    %v2669 = vadd.f32 %v2628, %v2668
    %v2670 = vpop.f32.mrb[0].mxu0
    %v2671 = vadd.f32 %v2630, %v2670
    %v2672 = vpop.f32.mrb[0].mxu0
    %v2673 = vpop.f32.mrb[0].mxu0
    %2674 = vdwg.mxu0
    %2675 = vst [vmem:[#allocation11] sm:$0xff] %v2669
    %2676 = vst [vmem:[#allocation11 + $0x8] sm:$0xff] %v2671
    // Predicated region
    $region34: #{tpu_custom_call.1} parent=1 // pred_check
      _
    $region35: #{tpu_custom_call.1} parent=1 // pred_check_branch
      %2678 = sbr.rel (0) target = $region37
    $region36: #{tpu_custom_call.1} parent=1 // pred_region
      %s2680 = ssub.s32 128, 128
      %2681 = vsyncadd [#allocation4], %s2680
      %s2683 = sshll.u32 [#allocation10], 4
      %s2684 = int_to_ptr.vmem [resolvable:$true] %s2683
      %2686 = dma.vmem_to_hbm [thread:$0]  %s2684, 128, %s4, [#allocation4]
    $region37: #{tpu_custom_call.1} parent=1 // pred_fallthru
      _
    // Predicated region
    $region38: #{tpu_custom_call.1} parent=1 // pred_check
      _
    $region39: #{tpu_custom_call.1} parent=1 // pred_check_branch
      %2688 = sbr.rel (0) target = $region41
    $region40: #{tpu_custom_call.1} parent=1 // pred_region
      %s2690 = ssub.s32 256, 256
      %2691 = vsyncadd [#allocation12], %s2690
      %s2693 = sshll.u32 [#allocation11], 4
      %s2694 = int_to_ptr.vmem [resolvable:$true] %s2693
      %2696 = dma.vmem_to_hbm [thread:$0]  %s2694, 256, %s5, [#allocation12]
    $region41: #{tpu_custom_call.1} parent=1 // pred_fallthru
      _
    // Predicated region
    $region42: #{tpu_custom_call.1} parent=1 // pred_check
      _
    $region43: #{tpu_custom_call.1} parent=1 // pred_check_branch
      %2698 = sbr.rel (0) target = $region45
    $region44: #{tpu_custom_call.1} parent=1 // pred_region
      %2699 = dma.done [#allocation4], 128
    $region45: #{tpu_custom_call.1} parent=1 // pred_fallthru
      _
    // Predicated region
    $region46: #{tpu_custom_call.1} parent=1 // pred_check
      _
    $region47: #{tpu_custom_call.1} parent=1 // pred_check_branch
      %2701 = sbr.rel (0) target = $region49
    $region48: #{tpu_custom_call.1} parent=1 // pred_region
      %2702 = dma.done [#allocation12], 256
    $region49: #{tpu_custom_call.1} parent=1 // pred_fallthru
      _
    %2703 = vsyncpa [#allocation3], 1
    %2704 = vsyncpa [#allocation6], 1
    %2705 = vsyncpa [#allocation9], 1
    %2706 = vsyncpa [#allocation4], 1
    %2707 = vsyncpa [#allocation12], 1

</llo_original>
